<compile_context>
chip_gen: v6e
topology: v6e:2x2x1
jax: 0.10.0
libtpu: 0.0.40
codegen_flags: <defaults>
</compile_context>

<pallas_src>
import jax
import jax.numpy as jnp
from jax.experimental import pallas as pl
from jax.experimental.pallas import tpu as pltpu


def _fused_conv1x1_linear_kernel(cparams_ref, x_ref, wlin_ref, blin_ref,
                                 o_ref, acc_ref):
    """Fused 1x1-conv + flatten + linear, accumulated over sublane-row slabs.

    cparams_ref : SMEM (4,)            [conv_w0, conv_w1, conv_w2, conv_b]
    x_ref       : VMEM (3, Rb, 128)    input channels x row-slab x lanes
    wlin_ref    : VMEM (n_out, Rb, 128) linear weight, same layout as x
    blin_ref    : VMEM (n_out, 1)      linear bias
    o_ref       : VMEM (n_out, 1)      output logits (wrapper -> (1, n_out))
    acc_ref     : VMEM (n_out, 128) f32 scratch, persistent across grid steps
    """
    step = pl.program_id(0)
    n_out = wlin_ref.shape[0]

    @pl.when(step == 0)
    def _init():
        acc_ref[...] = jnp.zeros_like(acc_ref)

    # Conv weights / bias as scalars from SMEM -> pure scalar-broadcast FMAs.
    wc0 = cparams_ref[0]
    wc1 = cparams_ref[1]
    wc2 = cparams_ref[2]
    cb = cparams_ref[3]

    # 1x1 conv over channels on the VPU, dense (Rb, 128) slabs.
    conv = x_ref[0] * wc0 + x_ref[1] * wc1 + x_ref[2] * wc2 + cb   # (Rb, 128)

    # Linear: per output row, multiply against the matching weight slab and
    # reduce over sublanes; lanes are reduced once at finalize.
    for j in range(n_out):                                         # static, n_out = 5
        partial = jnp.sum(wlin_ref[j] * conv, axis=0, keepdims=True)   # (1, 128)
        acc_ref[j:j + 1, :] += partial

    @pl.when(step == pl.num_programs(0) - 1)
    def _finalize():
        out = jnp.sum(acc_ref[...], axis=-1, keepdims=True) + blin_ref[...]
        o_ref[...] = out.astype(o_ref.dtype)


def model_forward(x, conv_w, conv_b, lin_w, lin_b, *, num_steps=1):
    """x: (1, 3, 224, 224) NCHW.  Returns (1, 5).

    num_steps: grid depth over the reduction axis.  1 (default) is best on
    v6e/v7x; 7 gives a shallow DMA-hiding pipeline on v5e.  Must keep the
    per-step slab a multiple of 8 rows (valid values: 1, 7, 49).
    """
    N, C, H, W = x.shape
    assert N == 1 and C == 3
    LANES = 128
    P = H * W                                   # 224*224 = 50176
    assert P % LANES == 0
    R = P // LANES                              # 392 sublane rows
    n_out = lin_w.shape[0]

    assert R % num_steps == 0, "num_steps must divide 392"
    Rb = R // num_steps
    assert Rb % 8 == 0, "per-step slab must be a multiple of 8 rows (use 1, 7 or 49)"

    # Free, contiguous reshapes (row-major): (3, P) -> (3, R, 128), etc.
    x3 = x.reshape(C, R, LANES).astype(jnp.float32)                 # (3, 392, 128)
    wlin3 = lin_w.reshape(n_out, R, LANES).astype(jnp.float32)      # (5, 392, 128)
    blin = lin_b.reshape(n_out, 1).astype(jnp.float32)              # (5, 1)
    cparams = jnp.concatenate(
        [conv_w.reshape(C).astype(jnp.float32),
         conv_b.reshape(1).astype(jnp.float32)])                    # (4,) scalars

    out = pl.pallas_call(
        _fused_conv1x1_linear_kernel,
        out_shape=jax.ShapeDtypeStruct((n_out, 1), jnp.float32),
        grid_spec=pltpu.PrefetchScalarGridSpec(
            num_scalar_prefetch=0,
            grid=(num_steps,),
            in_specs=[
                # conv weight + bias scalars, in SMEM
                pl.BlockSpec(memory_space=pltpu.MemorySpace.SMEM),
                # input slab: (3, Rb, 128)
                pl.BlockSpec((C, Rb, LANES), lambda k: (0, k, 0)),
                # linear weight slab: (5, Rb, 128)
                pl.BlockSpec((n_out, Rb, LANES), lambda k: (0, k, 0)),
                # linear bias (resident)
                pl.BlockSpec((n_out, 1), lambda k: (0, 0)),
            ],
            out_specs=pl.BlockSpec((n_out, 1), lambda k: (0, 0)),
            scratch_shapes=[pltpu.VMEM((n_out, LANES), jnp.float32)],
        ),
        compiler_params=pltpu.CompilerParams(
            dimension_semantics=("arbitrary",)),      # reduction axis
    )(cparams, x3, wlin3, blin)

    # (5, 1) -> (1, 5): trivial reshape outside the kernel.
    return out.reshape(1, n_out)


def _reference(x, conv_w, conv_b, lin_w, lin_b):
    N, C, H, W = x.shape
    conv = jnp.einsum('nchw,oc->nohw', x, conv_w.reshape(1, C)) \
        + conv_b.reshape(1, 1, 1, 1)
    flat = conv.reshape(1, -1)
    return flat @ lin_w.T + lin_b[None, :]


if __name__ == "__main__":
    key = jax.random.PRNGKey(0)
    k_x, k_cw, k_cb, k_lw, k_lb = jax.random.split(key, 5)

    # Shapes are fixed by the module: Linear(224*224, 5) requires a
    # (1, 3, 224, 224) input so that conv -> view(1, -1) yields 50176 features.
    H = W = 224
    C_in, C_out = 3, 1
    P = H * W
    N_OUT = 5

    x = jax.random.normal(k_x, (1, C_in, H, W), dtype=jnp.float32)
    conv_w = jax.random.uniform(k_cw, (C_out, C_in, 1, 1), jnp.float32, -0.5, 0.5)
    conv_b = jax.random.uniform(k_cb, (C_out,), jnp.float32, -0.5, 0.5)
    lin_w = jax.random.uniform(k_lw, (N_OUT, P), jnp.float32, -0.01, 0.01)
    lin_b = jax.random.uniform(k_lb, (N_OUT,), jnp.float32, -0.01, 0.01)

    y = model_forward(x, conv_w, conv_b, lin_w, lin_b)   # num_steps=7 on v5e
    y = jax.block_until_ready(y)

    y_ref = _reference(x, conv_w, conv_b, lin_w, lin_b)
    assert y.shape == (1, N_OUT)
    assert jnp.allclose(y, y_ref, rtol=1e-4, atol=1e-4), (y, y_ref)

    print("KERNEL_OK")
</pallas_src>

<mosaic_0001>
module attributes {stable_mosaic.version = 11 : i64} {
  func.func @_fused_conv1x1_linear_kernel(%arg0: i32, %arg1: memref<4xf32, #tpu.memory_space<smem>>, %arg2: memref<3x392x128xf32, #tpu.memory_space<vmem>>, %arg3: memref<5x392x128xf32, #tpu.memory_space<vmem>>, %arg4: memref<5x1xf32, #tpu.memory_space<vmem>>, %arg5: memref<5x1xf32, #tpu.memory_space<vmem>>, %arg6: memref<5x128xf32, #tpu.memory_space<vmem>>) attributes {dimension_semantics = [#tpu.dimension_semantics<arbitrary>], iteration_bounds = array<i64: 1>, scalar_prefetch = 0 : i64, scratch_operands = 1 : i64, tpu.core_type = #tpu.core_type<tc>, window_params = [{transform_indices = @transform_0, window_bounds = array<i64: 4>}, {transform_indices = @transform_1, window_bounds = array<i64: 3, 392, 128>}, {transform_indices = @transform_2, window_bounds = array<i64: 5, 392, 128>}, {pipeline_mode = #tpu.pipeline_mode<synchronous>, transform_indices = @transform_3, window_bounds = array<i64: 5, 1>}, {pipeline_mode = #tpu.pipeline_mode<synchronous>, transform_indices = @transform_4, window_bounds = array<i64: 5, 1>}]} {
    %c0_i32 = arith.constant 0 : i32
    %0 = arith.cmpi eq, %arg0, %c0_i32 : i32
    %1 = arith.extui %0 : i1 to i32
    %c0_i32_0 = arith.constant 0 : i32
    %2 = arith.cmpi ne, %1, %c0_i32_0 : i32
    scf.if %2 {
      %cst_50 = arith.constant 0.000000e+00 : f32
      %66 = vector.broadcast %cst_50 : f32 to vector<5x128xf32>
      %c0_51 = arith.constant 0 : index
      %c0_52 = arith.constant 0 : index
      %67 = vector.load %arg6[%c0_51, %c0_52] : memref<5x128xf32, #tpu.memory_space<vmem>>, vector<5x128xf32>
      tpu.vector_store %arg6[%c0_51, %c0_52], %66 {strides = array<i32>} : memref<5x128xf32, #tpu.memory_space<vmem>>, vector<5x128xf32>,
    } else {
    }
    %c0 = arith.constant 0 : index
    %3 = memref.load %arg1[%c0] : memref<4xf32, #tpu.memory_space<smem>>
    %c1 = arith.constant 1 : index
    %4 = memref.load %arg1[%c1] : memref<4xf32, #tpu.memory_space<smem>>
    %c2 = arith.constant 2 : index
    %5 = memref.load %arg1[%c2] : memref<4xf32, #tpu.memory_space<smem>>
    %c3 = arith.constant 3 : index
    %6 = memref.load %arg1[%c3] : memref<4xf32, #tpu.memory_space<smem>>
    %c0_1 = arith.constant 0 : index
    %c0_2 = arith.constant 0 : index
    %c0_3 = arith.constant 0 : index
    %7 = vector.load %arg2[%c0_1, %c0_2, %c0_3] : memref<3x392x128xf32, #tpu.memory_space<vmem>>, vector<1x392x128xf32>
    %8 = vector.shape_cast %7 : vector<1x392x128xf32> to vector<392x128xf32>
    %9 = vector.broadcast %3 : f32 to vector<392x128xf32>
    %10 = arith.mulf %8, %9 : vector<392x128xf32>
    %c1_4 = arith.constant 1 : index
    %c0_5 = arith.constant 0 : index
    %c0_6 = arith.constant 0 : index
    %11 = vector.load %arg2[%c1_4, %c0_5, %c0_6] : memref<3x392x128xf32, #tpu.memory_space<vmem>>, vector<1x392x128xf32>
    %12 = vector.shape_cast %11 : vector<1x392x128xf32> to vector<392x128xf32>
    %13 = vector.broadcast %4 : f32 to vector<392x128xf32>
    %14 = arith.mulf %12, %13 : vector<392x128xf32>
    %15 = arith.addf %10, %14 : vector<392x128xf32>
    %c2_7 = arith.constant 2 : index
    %c0_8 = arith.constant 0 : index
    %c0_9 = arith.constant 0 : index
    %16 = vector.load %arg2[%c2_7, %c0_8, %c0_9] : memref<3x392x128xf32, #tpu.memory_space<vmem>>, vector<1x392x128xf32>
    %17 = vector.shape_cast %16 : vector<1x392x128xf32> to vector<392x128xf32>
    %18 = vector.broadcast %5 : f32 to vector<392x128xf32>
    %19 = arith.mulf %17, %18 : vector<392x128xf32>
    %20 = arith.addf %15, %19 : vector<392x128xf32>
    %21 = vector.broadcast %6 : f32 to vector<392x128xf32>
    %22 = arith.addf %20, %21 : vector<392x128xf32>
    %c0_10 = arith.constant 0 : index
    %c0_11 = arith.constant 0 : index
    %c0_12 = arith.constant 0 : index
    %23 = vector.load %arg3[%c0_10, %c0_11, %c0_12] : memref<5x392x128xf32, #tpu.memory_space<vmem>>, vector<1x392x128xf32>
    %24 = vector.shape_cast %23 : vector<1x392x128xf32> to vector<392x128xf32>
    %25 = arith.mulf %24, %22 : vector<392x128xf32>
    %cst = arith.constant dense<0.000000e+00> : vector<128xf32>
    %26 = vector.multi_reduction <add>, %25, %cst [0] : vector<392x128xf32> to vector<128xf32>
    %27 = vector.shape_cast %26 : vector<128xf32> to vector<1x128xf32>
    %c0_13 = arith.constant 0 : index
    %c0_14 = arith.constant 0 : index
    %28 = vector.load %arg6[%c0_13, %c0_14] : memref<5x128xf32, #tpu.memory_space<vmem>>, vector<1x128xf32>
    %29 = arith.addf %28, %27 : vector<1x128xf32>
    %c0_15 = arith.constant 0 : index
    %c0_16 = arith.constant 0 : index
    %30 = vector.load %arg6[%c0_15, %c0_16] : memref<5x128xf32, #tpu.memory_space<vmem>>, vector<1x128xf32>
    tpu.vector_store %arg6[%c0_15, %c0_16], %29 {strides = array<i32>} : memref<5x128xf32, #tpu.memory_space<vmem>>, vector<1x128xf32>,
    %c1_17 = arith.constant 1 : index
    %c0_18 = arith.constant 0 : index
    %c0_19 = arith.constant 0 : index
    %31 = vector.load %arg3[%c1_17, %c0_18, %c0_19] : memref<5x392x128xf32, #tpu.memory_space<vmem>>, vector<1x392x128xf32>
    %32 = vector.shape_cast %31 : vector<1x392x128xf32> to vector<392x128xf32>
    %33 = arith.mulf %32, %22 : vector<392x128xf32>
    %cst_20 = arith.constant dense<0.000000e+00> : vector<128xf32>
    %34 = vector.multi_reduction <add>, %33, %cst_20 [0] : vector<392x128xf32> to vector<128xf32>
    %35 = vector.shape_cast %34 : vector<128xf32> to vector<1x128xf32>
    %c1_21 = arith.constant 1 : index
    %c0_22 = arith.constant 0 : index
    %36 = vector.load %arg6[%c1_21, %c0_22] : memref<5x128xf32, #tpu.memory_space<vmem>>, vector<1x128xf32>
    %37 = arith.addf %36, %35 : vector<1x128xf32>
    %c1_23 = arith.constant 1 : index
    %c0_24 = arith.constant 0 : index
    %38 = vector.load %arg6[%c1_23, %c0_24] : memref<5x128xf32, #tpu.memory_space<vmem>>, vector<1x128xf32>
    tpu.vector_store %arg6[%c1_23, %c0_24], %37 {strides = array<i32>} : memref<5x128xf32, #tpu.memory_space<vmem>>, vector<1x128xf32>,
    %c2_25 = arith.constant 2 : index
    %c0_26 = arith.constant 0 : index
    %c0_27 = arith.constant 0 : index
    %39 = vector.load %arg3[%c2_25, %c0_26, %c0_27] : memref<5x392x128xf32, #tpu.memory_space<vmem>>, vector<1x392x128xf32>
    %40 = vector.shape_cast %39 : vector<1x392x128xf32> to vector<392x128xf32>
    %41 = arith.mulf %40, %22 : vector<392x128xf32>
    %cst_28 = arith.constant dense<0.000000e+00> : vector<128xf32>
    %42 = vector.multi_reduction <add>, %41, %cst_28 [0] : vector<392x128xf32> to vector<128xf32>
    %43 = vector.shape_cast %42 : vector<128xf32> to vector<1x128xf32>
    %c2_29 = arith.constant 2 : index
    %c0_30 = arith.constant 0 : index
    %44 = vector.load %arg6[%c2_29, %c0_30] : memref<5x128xf32, #tpu.memory_space<vmem>>, vector<1x128xf32>
    %45 = arith.addf %44, %43 : vector<1x128xf32>
    %c2_31 = arith.constant 2 : index
    %c0_32 = arith.constant 0 : index
    %46 = vector.load %arg6[%c2_31, %c0_32] : memref<5x128xf32, #tpu.memory_space<vmem>>, vector<1x128xf32>
    tpu.vector_store %arg6[%c2_31, %c0_32], %45 {strides = array<i32>} : memref<5x128xf32, #tpu.memory_space<vmem>>, vector<1x128xf32>,
    %c3_33 = arith.constant 3 : index
    %c0_34 = arith.constant 0 : index
    %c0_35 = arith.constant 0 : index
    %47 = vector.load %arg3[%c3_33, %c0_34, %c0_35] : memref<5x392x128xf32, #tpu.memory_space<vmem>>, vector<1x392x128xf32>
    %48 = vector.shape_cast %47 : vector<1x392x128xf32> to vector<392x128xf32>
    %49 = arith.mulf %48, %22 : vector<392x128xf32>
    %cst_36 = arith.constant dense<0.000000e+00> : vector<128xf32>
    %50 = vector.multi_reduction <add>, %49, %cst_36 [0] : vector<392x128xf32> to vector<128xf32>
    %51 = vector.shape_cast %50 : vector<128xf32> to vector<1x128xf32>
    %c3_37 = arith.constant 3 : index
    %c0_38 = arith.constant 0 : index
    %52 = vector.load %arg6[%c3_37, %c0_38] : memref<5x128xf32, #tpu.memory_space<vmem>>, vector<1x128xf32>
    %53 = arith.addf %52, %51 : vector<1x128xf32>
    %c3_39 = arith.constant 3 : index
    %c0_40 = arith.constant 0 : index
    %54 = vector.load %arg6[%c3_39, %c0_40] : memref<5x128xf32, #tpu.memory_space<vmem>>, vector<1x128xf32>
    tpu.vector_store %arg6[%c3_39, %c0_40], %53 {strides = array<i32>} : memref<5x128xf32, #tpu.memory_space<vmem>>, vector<1x128xf32>,
    %c4 = arith.constant 4 : index
    %c0_41 = arith.constant 0 : index
    %c0_42 = arith.constant 0 : index
    %55 = vector.load %arg3[%c4, %c0_41, %c0_42] : memref<5x392x128xf32, #tpu.memory_space<vmem>>, vector<1x392x128xf32>
    %56 = vector.shape_cast %55 : vector<1x392x128xf32> to vector<392x128xf32>
    %57 = arith.mulf %56, %22 : vector<392x128xf32>
    %cst_43 = arith.constant dense<0.000000e+00> : vector<128xf32>
    %58 = vector.multi_reduction <add>, %57, %cst_43 [0] : vector<392x128xf32> to vector<128xf32>
    %59 = vector.shape_cast %58 : vector<128xf32> to vector<1x128xf32>
    %c4_44 = arith.constant 4 : index
    %c0_45 = arith.constant 0 : index
    %60 = vector.load %arg6[%c4_44, %c0_45] : memref<5x128xf32, #tpu.memory_space<vmem>>, vector<1x128xf32>
    %61 = arith.addf %60, %59 : vector<1x128xf32>
    %c4_46 = arith.constant 4 : index
    %c0_47 = arith.constant 0 : index
    %62 = vector.load %arg6[%c4_46, %c0_47] : memref<5x128xf32, #tpu.memory_space<vmem>>, vector<1x128xf32>
    tpu.vector_store %arg6[%c4_46, %c0_47], %61 {strides = array<i32>} : memref<5x128xf32, #tpu.memory_space<vmem>>, vector<1x128xf32>,
    %c0_i32_48 = arith.constant 0 : i32
    %63 = arith.cmpi eq, %arg0, %c0_i32_48 : i32
    %64 = arith.extui %63 : i1 to i32
    %c0_i32_49 = arith.constant 0 : i32
    %65 = arith.cmpi ne, %64, %c0_i32_49 : i32
    scf.if %65 {
      %c0_50 = arith.constant 0 : index
      %c0_51 = arith.constant 0 : index
      %66 = vector.load %arg6[%c0_50, %c0_51] : memref<5x128xf32, #tpu.memory_space<vmem>>, vector<5x128xf32>
      %cst_52 = arith.constant dense<0.000000e+00> : vector<5xf32>
      %67 = vector.multi_reduction <add>, %66, %cst_52 [1] : vector<5x128xf32> to vector<5xf32>
      %68 = vector.shape_cast %67 : vector<5xf32> to vector<5x1xf32>
      %c0_53 = arith.constant 0 : index
      %c0_54 = arith.constant 0 : index
      %69 = vector.load %arg4[%c0_53, %c0_54] : memref<5x1xf32, #tpu.memory_space<vmem>>, vector<5x1xf32>
      %70 = arith.addf %68, %69 : vector<5x1xf32>
      %c0_55 = arith.constant 0 : index
      %c0_56 = arith.constant 0 : index
      %71 = vector.load %arg5[%c0_55, %c0_56] : memref<5x1xf32, #tpu.memory_space<vmem>>, vector<5x1xf32>
      tpu.vector_store %arg5[%c0_55, %c0_56], %70 {strides = array<i32>} : memref<5x1xf32, #tpu.memory_space<vmem>>, vector<5x1xf32>,
    } else {
    }
    return
  }
  func.func @transform_0(%arg0: i32) -> i32 {
    %c0_i32 = arith.constant 0 : i32
    %c0_i32_0 = arith.constant 0 : i32
    return %c0_i32 : i32
  }
  func.func @transform_1(%arg0: i32) -> (i32, i32, i32) {
    %c0_i32 = arith.constant 0 : i32
    %c0_i32_0 = arith.constant 0 : i32
    %c0_i32_1 = arith.constant 0 : i32
    return %c0_i32, %arg0, %c0_i32_0 : i32, i32, i32
  }
  func.func @transform_2(%arg0: i32) -> (i32, i32, i32) {
    %c0_i32 = arith.constant 0 : i32
    %c0_i32_0 = arith.constant 0 : i32
    %c0_i32_1 = arith.constant 0 : i32
    return %c0_i32, %arg0, %c0_i32_0 : i32, i32, i32
  }
  func.func @transform_3(%arg0: i32) -> (i32, i32) {
    %c0_i32 = arith.constant 0 : i32
    %c0_i32_0 = arith.constant 0 : i32
    %c0_i32_1 = arith.constant 0 : i32
    return %c0_i32, %c0_i32_0 : i32, i32
  }
  func.func @transform_4(%arg0: i32) -> (i32, i32) {
    %c0_i32 = arith.constant 0 : i32
    %c0_i32_0 = arith.constant 0 : i32
    %c0_i32_1 = arith.constant 0 : i32
    return %c0_i32, %c0_i32_0 : i32, i32
  }
}

</mosaic_0001>

<llo_original>
// kernel: tpu_custom_call.1
$region0: #{tpu_custom_call.1}
  #allocation0 [shape = 'u32[]', space=smem, size = 0x4, offset = 0x4, fixed_abs, tag = 'smem constant byte address 0x4 - core index']
  #allocation1 [shape = 'u32[144,128]{1,0:T(1,128)}', space=vmem, size = 0x12000, scoped, tag = 'internal scratch']
  #allocation2 [shape = 'f32[5,128]{1,0:T(8,128)}', space=vmem, size = 0x1000, scoped, tag = 'scratch operand']
  %s0 = inlined_call_operand.vmem [shape: f32[4], index: 0, kind: input, shape index: {}]
  %s1 = inlined_call_operand.hbm [shape: f32[3,392,128], index: 1, kind: input, shape index: {}]
  %s2 = inlined_call_operand.hbm [shape: f32[5,392,128], index: 2, kind: input, shape index: {}]
  %s3 = inlined_call_operand.vmem [shape: f32[5,1], index: 3, kind: input, shape index: {}]
  %s4 = inlined_call_operand.vmem [shape: f32[5,1], index: 4, kind: output, shape index: {}]
  %s5 = sld [smem:[#allocation0]]
  $region46: #{tpu_custom_call.1} parent=0
    _
  %s7 = ssub.s32 1, %s5
  %s8 = scalar_select 0, %s7, %s5
  $region1: #{tpu_custom_call.1} parent=0
    #allocation3 [shape = 'u8[512]{0}', space=smem, size = 0x200, scoped, tag = 'input window, operand 0, single buffered']
    #allocation4 [shape = 's32[1]{0}', space=sflag, size = 0x4, scoped, tag = 'scoped memory for tpu_custom_call.1']
    #allocation5 [shape = 's32[1]{0}', space=sflag, size = 0x4, scoped, tag = 'scoped memory for tpu_custom_call.1']
    #allocation6 [shape = 'u8[602112]{0}', space=vmem, size = 0x93000, scoped, tag = 'input window, operand 1, single buffered']
    #allocation7 [shape = 'u8[1003520]{0}', space=vmem, size = 0xf5000, scoped, tag = 'input window, operand 2, single buffered']
    #allocation8 [shape = 's32[1]{0}', space=sflag, size = 0x4, scoped, tag = 'scoped memory for tpu_custom_call.1']
    %9 = vsyncpa [#allocation5], 0
    %10 = vsyncpa [#allocation4], 0
    %11 = vsyncpa [#allocation8], 0
    // Predicated region
    $region2: #{tpu_custom_call.1} parent=1 // pred_check
      _
    $region3: #{tpu_custom_call.1} parent=1 // pred_check_branch
      %13 = sbr.rel (0) target = $region5
    $region4: #{tpu_custom_call.1} parent=1 // pred_region
      %s15 = ssub.s32 16, 16
      %16 = vsyncadd [#allocation5], %s15
      %s18 = sshll.u32 %s0, 4
      %s19 = int_to_ptr.vmem [resolvable:$true] %s18
      %21 = dma.vmem_to_smem %s19, 16, [#allocation3], [#allocation5]
    $region5: #{tpu_custom_call.1} parent=1 // pred_fallthru
      _
    // Predicated region
    $region6: #{tpu_custom_call.1} parent=1 // pred_check
      _
    $region7: #{tpu_custom_call.1} parent=1 // pred_check_branch
      %23 = sbr.rel (0) target = $region9
    $region8: #{tpu_custom_call.1} parent=1 // pred_region
      %s25 = ssub.s32 18816, 18816
      %26 = vsyncadd [#allocation4], %s25
      %s27 = sshll.u32 [#allocation6], 4
      %s28 = int_to_ptr.vmem [resolvable:$true] %s27
      %33 = dma.hbm_to_vmem [thread:$0]  %s1, 18816, %s28, [#allocation4], 128, 128, 8
    $region9: #{tpu_custom_call.1} parent=1 // pred_fallthru
      _
    // Predicated region
    $region10: #{tpu_custom_call.1} parent=1 // pred_check
      _
    $region11: #{tpu_custom_call.1} parent=1 // pred_check_branch
      %35 = sbr.rel (0) target = $region13
    $region12: #{tpu_custom_call.1} parent=1 // pred_region
      %s37 = ssub.s32 31360, 31360
      %38 = vsyncadd [#allocation8], %s37
      %s39 = sshll.u32 [#allocation7], 4
      %s40 = int_to_ptr.vmem [resolvable:$true] %s39
      %45 = dma.hbm_to_vmem [thread:$0]  %s2, 31360, %s40, [#allocation8], 128, 128, 8
    $region13: #{tpu_custom_call.1} parent=1 // pred_fallthru
      _
    // Predicated region
    $region14: #{tpu_custom_call.1} parent=1 // pred_check
      _
    $region15: #{tpu_custom_call.1} parent=1 // pred_check_branch
      %47 = sbr.rel (0) target = $region17
    $region16: #{tpu_custom_call.1} parent=1 // pred_region
      _
    $region17: #{tpu_custom_call.1} parent=1 // pred_fallthru
      _
    // Predicated region
    $region18: #{tpu_custom_call.1} parent=1 // pred_check
      _
    $region19: #{tpu_custom_call.1} parent=1 // pred_check_branch
      %49 = sbr.rel (0) target = $region21
    $region20: #{tpu_custom_call.1} parent=1 // pred_region
      %50 = dma.done [#allocation5], 16
    $region21: #{tpu_custom_call.1} parent=1 // pred_fallthru
      _
    // Predicated region
    $region22: #{tpu_custom_call.1} parent=1 // pred_check
      _
    $region23: #{tpu_custom_call.1} parent=1 // pred_check_branch
      %52 = sbr.rel (0) target = $region25
    $region24: #{tpu_custom_call.1} parent=1 // pred_region
      %53 = dma.done [#allocation4], 18816
    $region25: #{tpu_custom_call.1} parent=1 // pred_fallthru
      _
    // Predicated region
    $region26: #{tpu_custom_call.1} parent=1 // pred_check
      _
    $region27: #{tpu_custom_call.1} parent=1 // pred_check_branch
      %55 = sbr.rel (0) target = $region29
    $region28: #{tpu_custom_call.1} parent=1 // pred_region
      %56 = dma.done [#allocation8], 31360
    $region29: #{tpu_custom_call.1} parent=1 // pred_fallthru
      _
    %57 = sfence
    %p58 = scmp.eq.s32.totalorder 0, 0
    // Predicated region
    $region30: #{tpu_custom_call.1} parent=1 // pred_check
      %p59 = pneg %p58
    $region31: #{tpu_custom_call.1} parent=1 // pred_check_branch
      %61 = sbr.rel (%p59) target = $region33
    $region32: #{tpu_custom_call.1} parent=1 // pred_region
      %62 = vst [vmem:[#allocation2] sm:$0x1f] 0.0
    $region33: #{tpu_custom_call.1} parent=1 // pred_fallthru
      _
    %s63 = sld [smem:[#allocation3]]
    %s64 = sld [smem:[#allocation3 + $0x1]]
    %s65 = sld [smem:[#allocation3 + $0x2]]
    %s66 = sld [smem:[#allocation3 + $0x3]]
    %v67 = vld [vmem:[#allocation6] sm:$0xff]
    %v68 = vld [vmem:[#allocation6 + $0x8] sm:$0xff]
    %v69 = vld [vmem:[#allocation6 + $0x10] sm:$0xff]
    %v70 = vld [vmem:[#allocation6 + $0x18] sm:$0xff]
    %v71 = vld [vmem:[#allocation6 + $0x20] sm:$0xff]
    %v72 = vld [vmem:[#allocation6 + $0x28] sm:$0xff]
    %v73 = vld [vmem:[#allocation6 + $0x30] sm:$0xff]
    %v74 = vld [vmem:[#allocation6 + $0x38] sm:$0xff]
    %v75 = vld [vmem:[#allocation6 + $0x40] sm:$0xff]
    %v76 = vld [vmem:[#allocation6 + $0x48] sm:$0xff]
    %v77 = vld [vmem:[#allocation6 + $0x50] sm:$0xff]
    %v78 = vld [vmem:[#allocation6 + $0x58] sm:$0xff]
    %v79 = vld [vmem:[#allocation6 + $0x60] sm:$0xff]
    %v80 = vld [vmem:[#allocation6 + $0x68] sm:$0xff]
    %v81 = vld [vmem:[#allocation6 + $0x70] sm:$0xff]
    %v82 = vld [vmem:[#allocation6 + $0x78] sm:$0xff]
    %v83 = vld [vmem:[#allocation6 + $0x80] sm:$0xff]
    %v84 = vld [vmem:[#allocation6 + $0x88] sm:$0xff]
    %v85 = vld [vmem:[#allocation6 + $0x90] sm:$0xff]
    %v86 = vld [vmem:[#allocation6 + $0x98] sm:$0xff]
    %v87 = vld [vmem:[#allocation6 + $0xa0] sm:$0xff]
    %v88 = vld [vmem:[#allocation6 + $0xa8] sm:$0xff]
    %v89 = vld [vmem:[#allocation6 + $0xb0] sm:$0xff]
    %v90 = vld [vmem:[#allocation6 + $0xb8] sm:$0xff]
    %v91 = vld [vmem:[#allocation6 + $0xc0] sm:$0xff]
    %v92 = vld [vmem:[#allocation6 + $0xc8] sm:$0xff]
    %v93 = vld [vmem:[#allocation6 + $0xd0] sm:$0xff]
    %v94 = vld [vmem:[#allocation6 + $0xd8] sm:$0xff]
    %v95 = vld [vmem:[#allocation6 + $0xe0] sm:$0xff]
    %v96 = vld [vmem:[#allocation6 + $0xe8] sm:$0xff]
    %v97 = vld [vmem:[#allocation6 + $0xf0] sm:$0xff]
    %v98 = vld [vmem:[#allocation6 + $0xf8] sm:$0xff]
    %v99 = vld [vmem:[#allocation6 + $0x100] sm:$0xff]
    %v100 = vld [vmem:[#allocation6 + $0x108] sm:$0xff]
    %v101 = vld [vmem:[#allocation6 + $0x110] sm:$0xff]
    %v102 = vld [vmem:[#allocation6 + $0x118] sm:$0xff]
    %v103 = vld [vmem:[#allocation6 + $0x120] sm:$0xff]
    %v104 = vld [vmem:[#allocation6 + $0x128] sm:$0xff]
    %v105 = vld [vmem:[#allocation6 + $0x130] sm:$0xff]
    %v106 = vld [vmem:[#allocation6 + $0x138] sm:$0xff]
    %v107 = vld [vmem:[#allocation6 + $0x140] sm:$0xff]
    %v108 = vld [vmem:[#allocation6 + $0x148] sm:$0xff]
    %v109 = vld [vmem:[#allocation6 + $0x150] sm:$0xff]
    %v110 = vld [vmem:[#allocation6 + $0x158] sm:$0xff]
    %v111 = vld [vmem:[#allocation6 + $0x160] sm:$0xff]
    %v112 = vld [vmem:[#allocation6 + $0x168] sm:$0xff]
    %v113 = vld [vmem:[#allocation6 + $0x170] sm:$0xff]
    %v114 = vld [vmem:[#allocation6 + $0x178] sm:$0xff]
    %v115 = vld [vmem:[#allocation6 + $0x180] sm:$0xff]
    %v116 = vstv %s63
    %v117 = vmul.f32 %v67, %v116
    %v118 = vmul.f32 %v68, %v116
    %v119 = vmul.f32 %v69, %v116
    %v120 = vmul.f32 %v70, %v116
    %v121 = vmul.f32 %v71, %v116
    %v122 = vmul.f32 %v72, %v116
    %v123 = vmul.f32 %v73, %v116
    %v124 = vmul.f32 %v74, %v116
    %v125 = vmul.f32 %v75, %v116
    %v126 = vmul.f32 %v76, %v116
    %v127 = vmul.f32 %v77, %v116
    %v128 = vmul.f32 %v78, %v116
    %v129 = vmul.f32 %v79, %v116
    %v130 = vmul.f32 %v80, %v116
    %v131 = vmul.f32 %v81, %v116
    %v132 = vmul.f32 %v82, %v116
    %v133 = vmul.f32 %v83, %v116
    %v134 = vmul.f32 %v84, %v116
    %v135 = vmul.f32 %v85, %v116
    %v136 = vmul.f32 %v86, %v116
    %v137 = vmul.f32 %v87, %v116
    %v138 = vmul.f32 %v88, %v116
    %v139 = vmul.f32 %v89, %v116
    %v140 = vmul.f32 %v90, %v116
    %v141 = vmul.f32 %v91, %v116
    %v142 = vmul.f32 %v92, %v116
    %v143 = vmul.f32 %v93, %v116
    %v144 = vmul.f32 %v94, %v116
    %v145 = vmul.f32 %v95, %v116
    %v146 = vmul.f32 %v96, %v116
    %v147 = vmul.f32 %v97, %v116
    %v148 = vmul.f32 %v98, %v116
    %v149 = vmul.f32 %v99, %v116
    %v150 = vmul.f32 %v100, %v116
    %v151 = vmul.f32 %v101, %v116
    %v152 = vmul.f32 %v102, %v116
    %v153 = vmul.f32 %v103, %v116
    %v154 = vmul.f32 %v104, %v116
    %v155 = vmul.f32 %v105, %v116
    %v156 = vmul.f32 %v106, %v116
    %v157 = vmul.f32 %v107, %v116
    %v158 = vmul.f32 %v108, %v116
    %v159 = vmul.f32 %v109, %v116
    %v160 = vmul.f32 %v110, %v116
    %v161 = vmul.f32 %v111, %v116
    %v162 = vmul.f32 %v112, %v116
    %v163 = vmul.f32 %v113, %v116
    %v164 = vmul.f32 %v114, %v116
    %v165 = vmul.f32 %v115, %v116
    %s166 = scalar_lea.vmem [#allocation6], 392
    %v167 = vld [vmem:[%s166] sm:$0xff]
    %v168 = vld [vmem:[%s166 + $0x8] sm:$0xff]
    %v169 = vld [vmem:[%s166 + $0x10] sm:$0xff]
    %v170 = vld [vmem:[%s166 + $0x18] sm:$0xff]
    %v171 = vld [vmem:[%s166 + $0x20] sm:$0xff]
    %v172 = vld [vmem:[%s166 + $0x28] sm:$0xff]
    %v173 = vld [vmem:[%s166 + $0x30] sm:$0xff]
    %v174 = vld [vmem:[%s166 + $0x38] sm:$0xff]
    %v175 = vld [vmem:[%s166 + $0x40] sm:$0xff]
    %v176 = vld [vmem:[%s166 + $0x48] sm:$0xff]
    %v177 = vld [vmem:[%s166 + $0x50] sm:$0xff]
    %v178 = vld [vmem:[%s166 + $0x58] sm:$0xff]
    %v179 = vld [vmem:[%s166 + $0x60] sm:$0xff]
    %v180 = vld [vmem:[%s166 + $0x68] sm:$0xff]
    %v181 = vld [vmem:[%s166 + $0x70] sm:$0xff]
    %v182 = vld [vmem:[%s166 + $0x78] sm:$0xff]
    %v183 = vld [vmem:[%s166 + $0x80] sm:$0xff]
    %v184 = vld [vmem:[%s166 + $0x88] sm:$0xff]
    %v185 = vld [vmem:[%s166 + $0x90] sm:$0xff]
    %v186 = vld [vmem:[%s166 + $0x98] sm:$0xff]
    %v187 = vld [vmem:[%s166 + $0xa0] sm:$0xff]
    %v188 = vld [vmem:[%s166 + $0xa8] sm:$0xff]
    %v189 = vld [vmem:[%s166 + $0xb0] sm:$0xff]
    %v190 = vld [vmem:[%s166 + $0xb8] sm:$0xff]
    %v191 = vld [vmem:[%s166 + $0xc0] sm:$0xff]
    %v192 = vld [vmem:[%s166 + $0xc8] sm:$0xff]
    %v193 = vld [vmem:[%s166 + $0xd0] sm:$0xff]
    %v194 = vld [vmem:[%s166 + $0xd8] sm:$0xff]
    %v195 = vld [vmem:[%s166 + $0xe0] sm:$0xff]
    %v196 = vld [vmem:[%s166 + $0xe8] sm:$0xff]
    %v197 = vld [vmem:[%s166 + $0xf0] sm:$0xff]
    %v198 = vld [vmem:[%s166 + $0xf8] sm:$0xff]
    %v199 = vld [vmem:[%s166 + $0x100] sm:$0xff]
    %v200 = vld [vmem:[%s166 + $0x108] sm:$0xff]
    %v201 = vld [vmem:[%s166 + $0x110] sm:$0xff]
    %v202 = vld [vmem:[%s166 + $0x118] sm:$0xff]
    %v203 = vld [vmem:[%s166 + $0x120] sm:$0xff]
    %v204 = vld [vmem:[%s166 + $0x128] sm:$0xff]
    %v205 = vld [vmem:[%s166 + $0x130] sm:$0xff]
    %v206 = vld [vmem:[%s166 + $0x138] sm:$0xff]
    %v207 = vld [vmem:[%s166 + $0x140] sm:$0xff]
    %v208 = vld [vmem:[%s166 + $0x148] sm:$0xff]
    %v209 = vld [vmem:[%s166 + $0x150] sm:$0xff]
    %v210 = vld [vmem:[%s166 + $0x158] sm:$0xff]
    %v211 = vld [vmem:[%s166 + $0x160] sm:$0xff]
    %v212 = vld [vmem:[%s166 + $0x168] sm:$0xff]
    %v213 = vld [vmem:[%s166 + $0x170] sm:$0xff]
    %v214 = vld [vmem:[%s166 + $0x178] sm:$0xff]
    %v215 = vld [vmem:[%s166 + $0x180] sm:$0xff]
    %v216 = vstv %s64
    %v217 = vmul.f32 %v167, %v216
    %v218 = vmul.f32 %v168, %v216
    %v219 = vmul.f32 %v169, %v216
    %v220 = vmul.f32 %v170, %v216
    %v221 = vmul.f32 %v171, %v216
    %v222 = vmul.f32 %v172, %v216
    %v223 = vmul.f32 %v173, %v216
    %v224 = vmul.f32 %v174, %v216
    %v225 = vmul.f32 %v175, %v216
    %v226 = vmul.f32 %v176, %v216
    %v227 = vmul.f32 %v177, %v216
    %v228 = vmul.f32 %v178, %v216
    %v229 = vmul.f32 %v179, %v216
    %v230 = vmul.f32 %v180, %v216
    %v231 = vmul.f32 %v181, %v216
    %v232 = vmul.f32 %v182, %v216
    %v233 = vmul.f32 %v183, %v216
    %v234 = vmul.f32 %v184, %v216
    %v235 = vmul.f32 %v185, %v216
    %v236 = vmul.f32 %v186, %v216
    %v237 = vmul.f32 %v187, %v216
    %v238 = vmul.f32 %v188, %v216
    %v239 = vmul.f32 %v189, %v216
    %v240 = vmul.f32 %v190, %v216
    %v241 = vmul.f32 %v191, %v216
    %v242 = vmul.f32 %v192, %v216
    %v243 = vmul.f32 %v193, %v216
    %v244 = vmul.f32 %v194, %v216
    %v245 = vmul.f32 %v195, %v216
    %v246 = vmul.f32 %v196, %v216
    %v247 = vmul.f32 %v197, %v216
    %v248 = vmul.f32 %v198, %v216
    %v249 = vmul.f32 %v199, %v216
    %v250 = vmul.f32 %v200, %v216
    %v251 = vmul.f32 %v201, %v216
    %v252 = vmul.f32 %v202, %v216
    %v253 = vmul.f32 %v203, %v216
    %v254 = vmul.f32 %v204, %v216
    %v255 = vmul.f32 %v205, %v216
    %v256 = vmul.f32 %v206, %v216
    %v257 = vmul.f32 %v207, %v216
    %v258 = vmul.f32 %v208, %v216
    %v259 = vmul.f32 %v209, %v216
    %v260 = vmul.f32 %v210, %v216
    %v261 = vmul.f32 %v211, %v216
    %v262 = vmul.f32 %v212, %v216
    %v263 = vmul.f32 %v213, %v216
    %v264 = vmul.f32 %v214, %v216
    %v265 = vmul.f32 %v215, %v216
    %v266 = vadd.f32 %v117, %v217
    %v267 = vadd.f32 %v118, %v218
    %v268 = vadd.f32 %v119, %v219
    %v269 = vadd.f32 %v120, %v220
    %v270 = vadd.f32 %v121, %v221
    %v271 = vadd.f32 %v122, %v222
    %v272 = vadd.f32 %v123, %v223
    %v273 = vadd.f32 %v124, %v224
    %v274 = vadd.f32 %v125, %v225
    %v275 = vadd.f32 %v126, %v226
    %v276 = vadd.f32 %v127, %v227
    %v277 = vadd.f32 %v128, %v228
    %v278 = vadd.f32 %v129, %v229
    %v279 = vadd.f32 %v130, %v230
    %v280 = vadd.f32 %v131, %v231
    %v281 = vadd.f32 %v132, %v232
    %v282 = vadd.f32 %v133, %v233
    %v283 = vadd.f32 %v134, %v234
    %v284 = vadd.f32 %v135, %v235
    %v285 = vadd.f32 %v136, %v236
    %v286 = vadd.f32 %v137, %v237
    %v287 = vadd.f32 %v138, %v238
    %v288 = vadd.f32 %v139, %v239
    %v289 = vadd.f32 %v140, %v240
    %v290 = vadd.f32 %v141, %v241
    %v291 = vadd.f32 %v142, %v242
    %v292 = vadd.f32 %v143, %v243
    %v293 = vadd.f32 %v144, %v244
    %v294 = vadd.f32 %v145, %v245
    %v295 = vadd.f32 %v146, %v246
    %v296 = vadd.f32 %v147, %v247
    %v297 = vadd.f32 %v148, %v248
    %v298 = vadd.f32 %v149, %v249
    %v299 = vadd.f32 %v150, %v250
    %v300 = vadd.f32 %v151, %v251
    %v301 = vadd.f32 %v152, %v252
    %v302 = vadd.f32 %v153, %v253
    %v303 = vadd.f32 %v154, %v254
    %v304 = vadd.f32 %v155, %v255
    %v305 = vadd.f32 %v156, %v256
    %v306 = vadd.f32 %v157, %v257
    %v307 = vadd.f32 %v158, %v258
    %v308 = vadd.f32 %v159, %v259
    %v309 = vadd.f32 %v160, %v260
    %v310 = vadd.f32 %v161, %v261
    %v311 = vadd.f32 %v162, %v262
    %v312 = vadd.f32 %v163, %v263
    %v313 = vadd.f32 %v164, %v264
    %v314 = vadd.f32 %v165, %v265
    %s315 = scalar_lea.vmem [#allocation6], 784
    %v316 = vld [vmem:[%s315] sm:$0xff]
    %v317 = vld [vmem:[%s315 + $0x8] sm:$0xff]
    %v318 = vld [vmem:[%s315 + $0x10] sm:$0xff]
    %v319 = vld [vmem:[%s315 + $0x18] sm:$0xff]
    %v320 = vld [vmem:[%s315 + $0x20] sm:$0xff]
    %v321 = vld [vmem:[%s315 + $0x28] sm:$0xff]
    %v322 = vld [vmem:[%s315 + $0x30] sm:$0xff]
    %v323 = vld [vmem:[%s315 + $0x38] sm:$0xff]
    %v324 = vld [vmem:[%s315 + $0x40] sm:$0xff]
    %v325 = vld [vmem:[%s315 + $0x48] sm:$0xff]
    %v326 = vld [vmem:[%s315 + $0x50] sm:$0xff]
    %v327 = vld [vmem:[%s315 + $0x58] sm:$0xff]
    %v328 = vld [vmem:[%s315 + $0x60] sm:$0xff]
    %v329 = vld [vmem:[%s315 + $0x68] sm:$0xff]
    %v330 = vld [vmem:[%s315 + $0x70] sm:$0xff]
    %v331 = vld [vmem:[%s315 + $0x78] sm:$0xff]
    %v332 = vld [vmem:[%s315 + $0x80] sm:$0xff]
    %v333 = vld [vmem:[%s315 + $0x88] sm:$0xff]
    %v334 = vld [vmem:[%s315 + $0x90] sm:$0xff]
    %v335 = vld [vmem:[%s315 + $0x98] sm:$0xff]
    %v336 = vld [vmem:[%s315 + $0xa0] sm:$0xff]
    %v337 = vld [vmem:[%s315 + $0xa8] sm:$0xff]
    %v338 = vld [vmem:[%s315 + $0xb0] sm:$0xff]
    %v339 = vld [vmem:[%s315 + $0xb8] sm:$0xff]
    %v340 = vld [vmem:[%s315 + $0xc0] sm:$0xff]
    %v341 = vld [vmem:[%s315 + $0xc8] sm:$0xff]
    %v342 = vld [vmem:[%s315 + $0xd0] sm:$0xff]
    %v343 = vld [vmem:[%s315 + $0xd8] sm:$0xff]
    %v344 = vld [vmem:[%s315 + $0xe0] sm:$0xff]
    %v345 = vld [vmem:[%s315 + $0xe8] sm:$0xff]
    %v346 = vld [vmem:[%s315 + $0xf0] sm:$0xff]
    %v347 = vld [vmem:[%s315 + $0xf8] sm:$0xff]
    %v348 = vld [vmem:[%s315 + $0x100] sm:$0xff]
    %v349 = vld [vmem:[%s315 + $0x108] sm:$0xff]
    %v350 = vld [vmem:[%s315 + $0x110] sm:$0xff]
    %v351 = vld [vmem:[%s315 + $0x118] sm:$0xff]
    %v352 = vld [vmem:[%s315 + $0x120] sm:$0xff]
    %v353 = vld [vmem:[%s315 + $0x128] sm:$0xff]
    %v354 = vld [vmem:[%s315 + $0x130] sm:$0xff]
    %v355 = vld [vmem:[%s315 + $0x138] sm:$0xff]
    %v356 = vld [vmem:[%s315 + $0x140] sm:$0xff]
    %v357 = vld [vmem:[%s315 + $0x148] sm:$0xff]
    %v358 = vld [vmem:[%s315 + $0x150] sm:$0xff]
    %v359 = vld [vmem:[%s315 + $0x158] sm:$0xff]
    %v360 = vld [vmem:[%s315 + $0x160] sm:$0xff]
    %v361 = vld [vmem:[%s315 + $0x168] sm:$0xff]
    %v362 = vld [vmem:[%s315 + $0x170] sm:$0xff]
    %v363 = vld [vmem:[%s315 + $0x178] sm:$0xff]
    %v364 = vld [vmem:[%s315 + $0x180] sm:$0xff]
    %v365 = vstv %s65
    %v366 = vmul.f32 %v316, %v365
    %v367 = vmul.f32 %v317, %v365
    %v368 = vmul.f32 %v318, %v365
    %v369 = vmul.f32 %v319, %v365
    %v370 = vmul.f32 %v320, %v365
    %v371 = vmul.f32 %v321, %v365
    %v372 = vmul.f32 %v322, %v365
    %v373 = vmul.f32 %v323, %v365
    %v374 = vmul.f32 %v324, %v365
    %v375 = vmul.f32 %v325, %v365
    %v376 = vmul.f32 %v326, %v365
    %v377 = vmul.f32 %v327, %v365
    %v378 = vmul.f32 %v328, %v365
    %v379 = vmul.f32 %v329, %v365
    %v380 = vmul.f32 %v330, %v365
    %v381 = vmul.f32 %v331, %v365
    %v382 = vmul.f32 %v332, %v365
    %v383 = vmul.f32 %v333, %v365
    %v384 = vmul.f32 %v334, %v365
    %v385 = vmul.f32 %v335, %v365
    %v386 = vmul.f32 %v336, %v365
    %v387 = vmul.f32 %v337, %v365
    %v388 = vmul.f32 %v338, %v365
    %v389 = vmul.f32 %v339, %v365
    %v390 = vmul.f32 %v340, %v365
    %v391 = vmul.f32 %v341, %v365
    %v392 = vmul.f32 %v342, %v365
    %v393 = vmul.f32 %v343, %v365
    %v394 = vmul.f32 %v344, %v365
    %v395 = vmul.f32 %v345, %v365
    %v396 = vmul.f32 %v346, %v365
    %v397 = vmul.f32 %v347, %v365
    %v398 = vmul.f32 %v348, %v365
    %v399 = vmul.f32 %v349, %v365
    %v400 = vmul.f32 %v350, %v365
    %v401 = vmul.f32 %v351, %v365
    %v402 = vmul.f32 %v352, %v365
    %v403 = vmul.f32 %v353, %v365
    %v404 = vmul.f32 %v354, %v365
    %v405 = vmul.f32 %v355, %v365
    %v406 = vmul.f32 %v356, %v365
    %v407 = vmul.f32 %v357, %v365
    %v408 = vmul.f32 %v358, %v365
    %v409 = vmul.f32 %v359, %v365
    %v410 = vmul.f32 %v360, %v365
    %v411 = vmul.f32 %v361, %v365
    %v412 = vmul.f32 %v362, %v365
    %v413 = vmul.f32 %v363, %v365
    %v414 = vmul.f32 %v364, %v365
    %v415 = vadd.f32 %v266, %v366
    %v416 = vadd.f32 %v267, %v367
    %v417 = vadd.f32 %v268, %v368
    %v418 = vadd.f32 %v269, %v369
    %v419 = vadd.f32 %v270, %v370
    %v420 = vadd.f32 %v271, %v371
    %v421 = vadd.f32 %v272, %v372
    %v422 = vadd.f32 %v273, %v373
    %v423 = vadd.f32 %v274, %v374
    %v424 = vadd.f32 %v275, %v375
    %v425 = vadd.f32 %v276, %v376
    %v426 = vadd.f32 %v277, %v377
    %v427 = vadd.f32 %v278, %v378
    %v428 = vadd.f32 %v279, %v379
    %v429 = vadd.f32 %v280, %v380
    %v430 = vadd.f32 %v281, %v381
    %v431 = vadd.f32 %v282, %v382
    %v432 = vadd.f32 %v283, %v383
    %v433 = vadd.f32 %v284, %v384
    %v434 = vadd.f32 %v285, %v385
    %v435 = vadd.f32 %v286, %v386
    %v436 = vadd.f32 %v287, %v387
    %v437 = vadd.f32 %v288, %v388
    %v438 = vadd.f32 %v289, %v389
    %v439 = vadd.f32 %v290, %v390
    %v440 = vadd.f32 %v291, %v391
    %v441 = vadd.f32 %v292, %v392
    %v442 = vadd.f32 %v293, %v393
    %v443 = vadd.f32 %v294, %v394
    %v444 = vadd.f32 %v295, %v395
    %v445 = vadd.f32 %v296, %v396
    %v446 = vadd.f32 %v297, %v397
    %v447 = vadd.f32 %v298, %v398
    %v448 = vadd.f32 %v299, %v399
    %v449 = vadd.f32 %v300, %v400
    %v450 = vadd.f32 %v301, %v401
    %v451 = vadd.f32 %v302, %v402
    %v452 = vadd.f32 %v303, %v403
    %v453 = vadd.f32 %v304, %v404
    %v454 = vadd.f32 %v305, %v405
    %v455 = vadd.f32 %v306, %v406
    %v456 = vadd.f32 %v307, %v407
    %v457 = vadd.f32 %v308, %v408
    %v458 = vadd.f32 %v309, %v409
    %v459 = vadd.f32 %v310, %v410
    %v460 = vadd.f32 %v311, %v411
    %v461 = vadd.f32 %v312, %v412
    %v462 = vadd.f32 %v313, %v413
    %v463 = vadd.f32 %v314, %v414
    %v464 = vstv %s66
    %v465 = vadd.f32 %v415, %v464
    %v466 = vadd.f32 %v416, %v464
    %v467 = vadd.f32 %v417, %v464
    %v468 = vadd.f32 %v418, %v464
    %v469 = vadd.f32 %v419, %v464
    %v470 = vadd.f32 %v420, %v464
    %v471 = vadd.f32 %v421, %v464
    %v472 = vadd.f32 %v422, %v464
    %v473 = vadd.f32 %v423, %v464
    %v474 = vadd.f32 %v424, %v464
    %v475 = vadd.f32 %v425, %v464
    %v476 = vadd.f32 %v426, %v464
    %v477 = vadd.f32 %v427, %v464
    %v478 = vadd.f32 %v428, %v464
    %v479 = vadd.f32 %v429, %v464
    %v480 = vadd.f32 %v430, %v464
    %v481 = vadd.f32 %v431, %v464
    %v482 = vadd.f32 %v432, %v464
    %v483 = vadd.f32 %v433, %v464
    %v484 = vadd.f32 %v434, %v464
    %v485 = vadd.f32 %v435, %v464
    %v486 = vadd.f32 %v436, %v464
    %v487 = vadd.f32 %v437, %v464
    %v488 = vadd.f32 %v438, %v464
    %v489 = vadd.f32 %v439, %v464
    %v490 = vadd.f32 %v440, %v464
    %v491 = vadd.f32 %v441, %v464
    %v492 = vadd.f32 %v442, %v464
    %v493 = vadd.f32 %v443, %v464
    %v494 = vadd.f32 %v444, %v464
    %v495 = vadd.f32 %v445, %v464
    %v496 = vadd.f32 %v446, %v464
    %v497 = vadd.f32 %v447, %v464
    %v498 = vadd.f32 %v448, %v464
    %v499 = vadd.f32 %v449, %v464
    %v500 = vadd.f32 %v450, %v464
    %v501 = vadd.f32 %v451, %v464
    %v502 = vadd.f32 %v452, %v464
    %v503 = vadd.f32 %v453, %v464
    %v504 = vadd.f32 %v454, %v464
    %v505 = vadd.f32 %v455, %v464
    %v506 = vadd.f32 %v456, %v464
    %v507 = vadd.f32 %v457, %v464
    %v508 = vadd.f32 %v458, %v464
    %v509 = vadd.f32 %v459, %v464
    %v510 = vadd.f32 %v460, %v464
    %v511 = vadd.f32 %v461, %v464
    %v512 = vadd.f32 %v462, %v464
    %v513 = vadd.f32 %v463, %v464
    %v514 = vld [vmem:[#allocation7] sm:$0xff]
    %v515 = vld [vmem:[#allocation7 + $0x8] sm:$0xff]
    %v516 = vld [vmem:[#allocation7 + $0x10] sm:$0xff]
    %v517 = vld [vmem:[#allocation7 + $0x18] sm:$0xff]
    %v518 = vld [vmem:[#allocation7 + $0x20] sm:$0xff]
    %v519 = vld [vmem:[#allocation7 + $0x28] sm:$0xff]
    %v520 = vld [vmem:[#allocation7 + $0x30] sm:$0xff]
    %v521 = vld [vmem:[#allocation7 + $0x38] sm:$0xff]
    %v522 = vld [vmem:[#allocation7 + $0x40] sm:$0xff]
    %v523 = vld [vmem:[#allocation7 + $0x48] sm:$0xff]
    %v524 = vld [vmem:[#allocation7 + $0x50] sm:$0xff]
    %v525 = vld [vmem:[#allocation7 + $0x58] sm:$0xff]
    %v526 = vld [vmem:[#allocation7 + $0x60] sm:$0xff]
    %v527 = vld [vmem:[#allocation7 + $0x68] sm:$0xff]
    %v528 = vld [vmem:[#allocation7 + $0x70] sm:$0xff]
    %v529 = vld [vmem:[#allocation7 + $0x78] sm:$0xff]
    %v530 = vld [vmem:[#allocation7 + $0x80] sm:$0xff]
    %v531 = vld [vmem:[#allocation7 + $0x88] sm:$0xff]
    %v532 = vld [vmem:[#allocation7 + $0x90] sm:$0xff]
    %v533 = vld [vmem:[#allocation7 + $0x98] sm:$0xff]
    %v534 = vld [vmem:[#allocation7 + $0xa0] sm:$0xff]
    %v535 = vld [vmem:[#allocation7 + $0xa8] sm:$0xff]
    %v536 = vld [vmem:[#allocation7 + $0xb0] sm:$0xff]
    %v537 = vld [vmem:[#allocation7 + $0xb8] sm:$0xff]
    %v538 = vld [vmem:[#allocation7 + $0xc0] sm:$0xff]
    %v539 = vld [vmem:[#allocation7 + $0xc8] sm:$0xff]
    %v540 = vld [vmem:[#allocation7 + $0xd0] sm:$0xff]
    %v541 = vld [vmem:[#allocation7 + $0xd8] sm:$0xff]
    %v542 = vld [vmem:[#allocation7 + $0xe0] sm:$0xff]
    %v543 = vld [vmem:[#allocation7 + $0xe8] sm:$0xff]
    %v544 = vld [vmem:[#allocation7 + $0xf0] sm:$0xff]
    %v545 = vld [vmem:[#allocation7 + $0xf8] sm:$0xff]
    %v546 = vld [vmem:[#allocation7 + $0x100] sm:$0xff]
    %v547 = vld [vmem:[#allocation7 + $0x108] sm:$0xff]
    %v548 = vld [vmem:[#allocation7 + $0x110] sm:$0xff]
    %v549 = vld [vmem:[#allocation7 + $0x118] sm:$0xff]
    %v550 = vld [vmem:[#allocation7 + $0x120] sm:$0xff]
    %v551 = vld [vmem:[#allocation7 + $0x128] sm:$0xff]
    %v552 = vld [vmem:[#allocation7 + $0x130] sm:$0xff]
    %v553 = vld [vmem:[#allocation7 + $0x138] sm:$0xff]
    %v554 = vld [vmem:[#allocation7 + $0x140] sm:$0xff]
    %v555 = vld [vmem:[#allocation7 + $0x148] sm:$0xff]
    %v556 = vld [vmem:[#allocation7 + $0x150] sm:$0xff]
    %v557 = vld [vmem:[#allocation7 + $0x158] sm:$0xff]
    %v558 = vld [vmem:[#allocation7 + $0x160] sm:$0xff]
    %v559 = vld [vmem:[#allocation7 + $0x168] sm:$0xff]
    %v560 = vld [vmem:[#allocation7 + $0x170] sm:$0xff]
    %v561 = vld [vmem:[#allocation7 + $0x178] sm:$0xff]
    %v562 = vld [vmem:[#allocation7 + $0x180] sm:$0xff]
    %v563 = vmul.f32 %v514, %v465
    %v564 = vmul.f32 %v515, %v466
    %v565 = vmul.f32 %v516, %v467
    %v566 = vmul.f32 %v517, %v468
    %v567 = vmul.f32 %v518, %v469
    %v568 = vmul.f32 %v519, %v470
    %v569 = vmul.f32 %v520, %v471
    %v570 = vmul.f32 %v521, %v472
    %v571 = vmul.f32 %v522, %v473
    %v572 = vmul.f32 %v523, %v474
    %v573 = vmul.f32 %v524, %v475
    %v574 = vmul.f32 %v525, %v476
    %v575 = vmul.f32 %v526, %v477
    %v576 = vmul.f32 %v527, %v478
    %v577 = vmul.f32 %v528, %v479
    %v578 = vmul.f32 %v529, %v480
    %v579 = vmul.f32 %v530, %v481
    %v580 = vmul.f32 %v531, %v482
    %v581 = vmul.f32 %v532, %v483
    %v582 = vmul.f32 %v533, %v484
    %v583 = vmul.f32 %v534, %v485
    %v584 = vmul.f32 %v535, %v486
    %v585 = vmul.f32 %v536, %v487
    %v586 = vmul.f32 %v537, %v488
    %v587 = vmul.f32 %v538, %v489
    %v588 = vmul.f32 %v539, %v490
    %v589 = vmul.f32 %v540, %v491
    %v590 = vmul.f32 %v541, %v492
    %v591 = vmul.f32 %v542, %v493
    %v592 = vmul.f32 %v543, %v494
    %v593 = vmul.f32 %v544, %v495
    %v594 = vmul.f32 %v545, %v496
    %v595 = vmul.f32 %v546, %v497
    %v596 = vmul.f32 %v547, %v498
    %v597 = vmul.f32 %v548, %v499
    %v598 = vmul.f32 %v549, %v500
    %v599 = vmul.f32 %v550, %v501
    %v600 = vmul.f32 %v551, %v502
    %v601 = vmul.f32 %v552, %v503
    %v602 = vmul.f32 %v553, %v504
    %v603 = vmul.f32 %v554, %v505
    %v604 = vmul.f32 %v555, %v506
    %v605 = vmul.f32 %v556, %v507
    %v606 = vmul.f32 %v557, %v508
    %v607 = vmul.f32 %v558, %v509
    %v608 = vmul.f32 %v559, %v510
    %v609 = vmul.f32 %v560, %v511
    %v610 = vmul.f32 %v561, %v512
    %v611 = vmul.f32 %v562, %v513
    %v612 = vadd.f32 %v563, %v564
    %v613 = vadd.f32 %v612, %v565
    %v614 = vadd.f32 %v613, %v566
    %v615 = vadd.f32 %v614, %v567
    %v616 = vadd.f32 %v615, %v568
    %v617 = vadd.f32 %v616, %v569
    %v618 = vadd.f32 %v617, %v570
    %v619 = vadd.f32 %v618, %v571
    %v620 = vadd.f32 %v619, %v572
    %v621 = vadd.f32 %v620, %v573
    %v622 = vadd.f32 %v621, %v574
    %v623 = vadd.f32 %v622, %v575
    %v624 = vadd.f32 %v623, %v576
    %v625 = vadd.f32 %v624, %v577
    %v626 = vadd.f32 %v625, %v578
    %v627 = vadd.f32 %v626, %v579
    %v628 = vadd.f32 %v627, %v580
    %v629 = vadd.f32 %v628, %v581
    %v630 = vadd.f32 %v629, %v582
    %v631 = vadd.f32 %v630, %v583
    %v632 = vadd.f32 %v631, %v584
    %v633 = vadd.f32 %v632, %v585
    %v634 = vadd.f32 %v633, %v586
    %v635 = vadd.f32 %v634, %v587
    %v636 = vadd.f32 %v635, %v588
    %v637 = vadd.f32 %v636, %v589
    %v638 = vadd.f32 %v637, %v590
    %v639 = vadd.f32 %v638, %v591
    %v640 = vadd.f32 %v639, %v592
    %v641 = vadd.f32 %v640, %v593
    %v642 = vadd.f32 %v641, %v594
    %v643 = vadd.f32 %v642, %v595
    %v644 = vadd.f32 %v643, %v596
    %v645 = vadd.f32 %v644, %v597
    %v646 = vadd.f32 %v645, %v598
    %v647 = vadd.f32 %v646, %v599
    %v648 = vadd.f32 %v647, %v600
    %v649 = vadd.f32 %v648, %v601
    %v650 = vadd.f32 %v649, %v602
    %v651 = vadd.f32 %v650, %v603
    %v652 = vadd.f32 %v651, %v604
    %v653 = vadd.f32 %v652, %v605
    %v654 = vadd.f32 %v653, %v606
    %v655 = vadd.f32 %v654, %v607
    %v656 = vadd.f32 %v655, %v608
    %v657 = vadd.f32 %v656, %v609
    %v658 = vadd.f32 %v657, %v610
    %v659 = vadd.f32 %v658, %v611
    %v660 = vrot.slane %v659, 4
    %v661 = vadd.f32 %v659, %v660
    %v662 = vrot.slane %v661, 2
    %v663 = vadd.f32 %v661, %v662
    %v664 = vrot.slane %v663, 1
    %v665 = vadd.f32 %v663, %v664
    %v666 = vld [vmem:[#allocation2] sm:$0x1]
    %v667 = vadd.f32 %v666, %v665
    %668 = vst [vmem:[#allocation2] sm:$0x1] %v667
    %s669 = scalar_lea.vmem [#allocation7], 392
    %v670 = vld [vmem:[%s669] sm:$0xff]
    %v671 = vld [vmem:[%s669 + $0x8] sm:$0xff]
    %v672 = vld [vmem:[%s669 + $0x10] sm:$0xff]
    %v673 = vld [vmem:[%s669 + $0x18] sm:$0xff]
    %v674 = vld [vmem:[%s669 + $0x20] sm:$0xff]
    %v675 = vld [vmem:[%s669 + $0x28] sm:$0xff]
    %v676 = vld [vmem:[%s669 + $0x30] sm:$0xff]
    %v677 = vld [vmem:[%s669 + $0x38] sm:$0xff]
    %v678 = vld [vmem:[%s669 + $0x40] sm:$0xff]
    %v679 = vld [vmem:[%s669 + $0x48] sm:$0xff]
    %v680 = vld [vmem:[%s669 + $0x50] sm:$0xff]
    %v681 = vld [vmem:[%s669 + $0x58] sm:$0xff]
    %v682 = vld [vmem:[%s669 + $0x60] sm:$0xff]
    %v683 = vld [vmem:[%s669 + $0x68] sm:$0xff]
    %v684 = vld [vmem:[%s669 + $0x70] sm:$0xff]
    %v685 = vld [vmem:[%s669 + $0x78] sm:$0xff]
    %v686 = vld [vmem:[%s669 + $0x80] sm:$0xff]
    %v687 = vld [vmem:[%s669 + $0x88] sm:$0xff]
    %v688 = vld [vmem:[%s669 + $0x90] sm:$0xff]
    %v689 = vld [vmem:[%s669 + $0x98] sm:$0xff]
    %v690 = vld [vmem:[%s669 + $0xa0] sm:$0xff]
    %v691 = vld [vmem:[%s669 + $0xa8] sm:$0xff]
    %v692 = vld [vmem:[%s669 + $0xb0] sm:$0xff]
    %v693 = vld [vmem:[%s669 + $0xb8] sm:$0xff]
    %v694 = vld [vmem:[%s669 + $0xc0] sm:$0xff]
    %v695 = vld [vmem:[%s669 + $0xc8] sm:$0xff]
    %v696 = vld [vmem:[%s669 + $0xd0] sm:$0xff]
    %v697 = vld [vmem:[%s669 + $0xd8] sm:$0xff]
    %v698 = vld [vmem:[%s669 + $0xe0] sm:$0xff]
    %v699 = vld [vmem:[%s669 + $0xe8] sm:$0xff]
    %v700 = vld [vmem:[%s669 + $0xf0] sm:$0xff]
    %v701 = vld [vmem:[%s669 + $0xf8] sm:$0xff]
    %v702 = vld [vmem:[%s669 + $0x100] sm:$0xff]
    %v703 = vld [vmem:[%s669 + $0x108] sm:$0xff]
    %v704 = vld [vmem:[%s669 + $0x110] sm:$0xff]
    %v705 = vld [vmem:[%s669 + $0x118] sm:$0xff]
    %v706 = vld [vmem:[%s669 + $0x120] sm:$0xff]
    %v707 = vld [vmem:[%s669 + $0x128] sm:$0xff]
    %v708 = vld [vmem:[%s669 + $0x130] sm:$0xff]
    %v709 = vld [vmem:[%s669 + $0x138] sm:$0xff]
    %v710 = vld [vmem:[%s669 + $0x140] sm:$0xff]
    %v711 = vld [vmem:[%s669 + $0x148] sm:$0xff]
    %v712 = vld [vmem:[%s669 + $0x150] sm:$0xff]
    %v713 = vld [vmem:[%s669 + $0x158] sm:$0xff]
    %v714 = vld [vmem:[%s669 + $0x160] sm:$0xff]
    %v715 = vld [vmem:[%s669 + $0x168] sm:$0xff]
    %v716 = vld [vmem:[%s669 + $0x170] sm:$0xff]
    %v717 = vld [vmem:[%s669 + $0x178] sm:$0xff]
    %v718 = vld [vmem:[%s669 + $0x180] sm:$0xff]
    %v719 = vmul.f32 %v670, %v465
    %v720 = vmul.f32 %v671, %v466
    %v721 = vmul.f32 %v672, %v467
    %v722 = vmul.f32 %v673, %v468
    %v723 = vmul.f32 %v674, %v469
    %v724 = vmul.f32 %v675, %v470
    %v725 = vmul.f32 %v676, %v471
    %v726 = vmul.f32 %v677, %v472
    %v727 = vmul.f32 %v678, %v473
    %v728 = vmul.f32 %v679, %v474
    %v729 = vmul.f32 %v680, %v475
    %v730 = vmul.f32 %v681, %v476
    %v731 = vmul.f32 %v682, %v477
    %v732 = vmul.f32 %v683, %v478
    %v733 = vmul.f32 %v684, %v479
    %v734 = vmul.f32 %v685, %v480
    %v735 = vmul.f32 %v686, %v481
    %v736 = vmul.f32 %v687, %v482
    %v737 = vmul.f32 %v688, %v483
    %v738 = vmul.f32 %v689, %v484
    %v739 = vmul.f32 %v690, %v485
    %v740 = vmul.f32 %v691, %v486
    %v741 = vmul.f32 %v692, %v487
    %v742 = vmul.f32 %v693, %v488
    %v743 = vmul.f32 %v694, %v489
    %v744 = vmul.f32 %v695, %v490
    %v745 = vmul.f32 %v696, %v491
    %v746 = vmul.f32 %v697, %v492
    %v747 = vmul.f32 %v698, %v493
    %v748 = vmul.f32 %v699, %v494
    %v749 = vmul.f32 %v700, %v495
    %v750 = vmul.f32 %v701, %v496
    %v751 = vmul.f32 %v702, %v497
    %v752 = vmul.f32 %v703, %v498
    %v753 = vmul.f32 %v704, %v499
    %v754 = vmul.f32 %v705, %v500
    %v755 = vmul.f32 %v706, %v501
    %v756 = vmul.f32 %v707, %v502
    %v757 = vmul.f32 %v708, %v503
    %v758 = vmul.f32 %v709, %v504
    %v759 = vmul.f32 %v710, %v505
    %v760 = vmul.f32 %v711, %v506
    %v761 = vmul.f32 %v712, %v507
    %v762 = vmul.f32 %v713, %v508
    %v763 = vmul.f32 %v714, %v509
    %v764 = vmul.f32 %v715, %v510
    %v765 = vmul.f32 %v716, %v511
    %v766 = vmul.f32 %v717, %v512
    %v767 = vmul.f32 %v718, %v513
    %v768 = vadd.f32 %v719, %v720
    %v769 = vadd.f32 %v768, %v721
    %v770 = vadd.f32 %v769, %v722
    %v771 = vadd.f32 %v770, %v723
    %v772 = vadd.f32 %v771, %v724
    %v773 = vadd.f32 %v772, %v725
    %v774 = vadd.f32 %v773, %v726
    %v775 = vadd.f32 %v774, %v727
    %v776 = vadd.f32 %v775, %v728
    %v777 = vadd.f32 %v776, %v729
    %v778 = vadd.f32 %v777, %v730
    %v779 = vadd.f32 %v778, %v731
    %v780 = vadd.f32 %v779, %v732
    %v781 = vadd.f32 %v780, %v733
    %v782 = vadd.f32 %v781, %v734
    %v783 = vadd.f32 %v782, %v735
    %v784 = vadd.f32 %v783, %v736
    %v785 = vadd.f32 %v784, %v737
    %v786 = vadd.f32 %v785, %v738
    %v787 = vadd.f32 %v786, %v739
    %v788 = vadd.f32 %v787, %v740
    %v789 = vadd.f32 %v788, %v741
    %v790 = vadd.f32 %v789, %v742
    %v791 = vadd.f32 %v790, %v743
    %v792 = vadd.f32 %v791, %v744
    %v793 = vadd.f32 %v792, %v745
    %v794 = vadd.f32 %v793, %v746
    %v795 = vadd.f32 %v794, %v747
    %v796 = vadd.f32 %v795, %v748
    %v797 = vadd.f32 %v796, %v749
    %v798 = vadd.f32 %v797, %v750
    %v799 = vadd.f32 %v798, %v751
    %v800 = vadd.f32 %v799, %v752
    %v801 = vadd.f32 %v800, %v753
    %v802 = vadd.f32 %v801, %v754
    %v803 = vadd.f32 %v802, %v755
    %v804 = vadd.f32 %v803, %v756
    %v805 = vadd.f32 %v804, %v757
    %v806 = vadd.f32 %v805, %v758
    %v807 = vadd.f32 %v806, %v759
    %v808 = vadd.f32 %v807, %v760
    %v809 = vadd.f32 %v808, %v761
    %v810 = vadd.f32 %v809, %v762
    %v811 = vadd.f32 %v810, %v763
    %v812 = vadd.f32 %v811, %v764
    %v813 = vadd.f32 %v812, %v765
    %v814 = vadd.f32 %v813, %v766
    %v815 = vadd.f32 %v814, %v767
    %v816 = vrot.slane %v815, 4
    %v817 = vadd.f32 %v815, %v816
    %v818 = vrot.slane %v817, 2
    %v819 = vadd.f32 %v817, %v818
    %v820 = vrot.slane %v819, 1
    %v821 = vadd.f32 %v819, %v820
    %v822 = vld [vmem:[#allocation2 + $0x1] sm:$0x1]
    %v823 = vadd.f32 %v822, %v821
    %824 = vst [vmem:[#allocation2 + $0x1] sm:$0x1] %v823
    %s825 = scalar_lea.vmem [#allocation7], 784
    %v826 = vld [vmem:[%s825] sm:$0xff]
    %v827 = vld [vmem:[%s825 + $0x8] sm:$0xff]
    %v828 = vld [vmem:[%s825 + $0x10] sm:$0xff]
    %v829 = vld [vmem:[%s825 + $0x18] sm:$0xff]
    %v830 = vld [vmem:[%s825 + $0x20] sm:$0xff]
    %v831 = vld [vmem:[%s825 + $0x28] sm:$0xff]
    %v832 = vld [vmem:[%s825 + $0x30] sm:$0xff]
    %v833 = vld [vmem:[%s825 + $0x38] sm:$0xff]
    %v834 = vld [vmem:[%s825 + $0x40] sm:$0xff]
    %v835 = vld [vmem:[%s825 + $0x48] sm:$0xff]
    %v836 = vld [vmem:[%s825 + $0x50] sm:$0xff]
    %v837 = vld [vmem:[%s825 + $0x58] sm:$0xff]
    %v838 = vld [vmem:[%s825 + $0x60] sm:$0xff]
    %v839 = vld [vmem:[%s825 + $0x68] sm:$0xff]
    %v840 = vld [vmem:[%s825 + $0x70] sm:$0xff]
    %v841 = vld [vmem:[%s825 + $0x78] sm:$0xff]
    %v842 = vld [vmem:[%s825 + $0x80] sm:$0xff]
    %v843 = vld [vmem:[%s825 + $0x88] sm:$0xff]
    %v844 = vld [vmem:[%s825 + $0x90] sm:$0xff]
    %v845 = vld [vmem:[%s825 + $0x98] sm:$0xff]
    %v846 = vld [vmem:[%s825 + $0xa0] sm:$0xff]
    %v847 = vld [vmem:[%s825 + $0xa8] sm:$0xff]
    %v848 = vld [vmem:[%s825 + $0xb0] sm:$0xff]
    %v849 = vld [vmem:[%s825 + $0xb8] sm:$0xff]
    %v850 = vld [vmem:[%s825 + $0xc0] sm:$0xff]
    %v851 = vld [vmem:[%s825 + $0xc8] sm:$0xff]
    %v852 = vld [vmem:[%s825 + $0xd0] sm:$0xff]
    %v853 = vld [vmem:[%s825 + $0xd8] sm:$0xff]
    %v854 = vld [vmem:[%s825 + $0xe0] sm:$0xff]
    %v855 = vld [vmem:[%s825 + $0xe8] sm:$0xff]
    %v856 = vld [vmem:[%s825 + $0xf0] sm:$0xff]
    %v857 = vld [vmem:[%s825 + $0xf8] sm:$0xff]
    %v858 = vld [vmem:[%s825 + $0x100] sm:$0xff]
    %v859 = vld [vmem:[%s825 + $0x108] sm:$0xff]
    %v860 = vld [vmem:[%s825 + $0x110] sm:$0xff]
    %v861 = vld [vmem:[%s825 + $0x118] sm:$0xff]
    %v862 = vld [vmem:[%s825 + $0x120] sm:$0xff]
    %v863 = vld [vmem:[%s825 + $0x128] sm:$0xff]
    %v864 = vld [vmem:[%s825 + $0x130] sm:$0xff]
    %v865 = vld [vmem:[%s825 + $0x138] sm:$0xff]
    %v866 = vld [vmem:[%s825 + $0x140] sm:$0xff]
    %v867 = vld [vmem:[%s825 + $0x148] sm:$0xff]
    %v868 = vld [vmem:[%s825 + $0x150] sm:$0xff]
    %v869 = vld [vmem:[%s825 + $0x158] sm:$0xff]
    %v870 = vld [vmem:[%s825 + $0x160] sm:$0xff]
    %v871 = vld [vmem:[%s825 + $0x168] sm:$0xff]
    %v872 = vld [vmem:[%s825 + $0x170] sm:$0xff]
    %v873 = vld [vmem:[%s825 + $0x178] sm:$0xff]
    %v874 = vld [vmem:[%s825 + $0x180] sm:$0xff]
    %v875 = vmul.f32 %v826, %v465
    %v876 = vmul.f32 %v827, %v466
    %v877 = vmul.f32 %v828, %v467
    %v878 = vmul.f32 %v829, %v468
    %v879 = vmul.f32 %v830, %v469
    %v880 = vmul.f32 %v831, %v470
    %v881 = vmul.f32 %v832, %v471
    %v882 = vmul.f32 %v833, %v472
    %v883 = vmul.f32 %v834, %v473
    %v884 = vmul.f32 %v835, %v474
    %v885 = vmul.f32 %v836, %v475
    %v886 = vmul.f32 %v837, %v476
    %v887 = vmul.f32 %v838, %v477
    %v888 = vmul.f32 %v839, %v478
    %v889 = vmul.f32 %v840, %v479
    %v890 = vmul.f32 %v841, %v480
    %v891 = vmul.f32 %v842, %v481
    %v892 = vmul.f32 %v843, %v482
    %v893 = vmul.f32 %v844, %v483
    %v894 = vmul.f32 %v845, %v484
    %v895 = vmul.f32 %v846, %v485
    %v896 = vmul.f32 %v847, %v486
    %v897 = vmul.f32 %v848, %v487
    %v898 = vmul.f32 %v849, %v488
    %v899 = vmul.f32 %v850, %v489
    %v900 = vmul.f32 %v851, %v490
    %v901 = vmul.f32 %v852, %v491
    %v902 = vmul.f32 %v853, %v492
    %v903 = vmul.f32 %v854, %v493
    %v904 = vmul.f32 %v855, %v494
    %v905 = vmul.f32 %v856, %v495
    %v906 = vmul.f32 %v857, %v496
    %v907 = vmul.f32 %v858, %v497
    %v908 = vmul.f32 %v859, %v498
    %v909 = vmul.f32 %v860, %v499
    %v910 = vmul.f32 %v861, %v500
    %v911 = vmul.f32 %v862, %v501
    %v912 = vmul.f32 %v863, %v502
    %v913 = vmul.f32 %v864, %v503
    %v914 = vmul.f32 %v865, %v504
    %v915 = vmul.f32 %v866, %v505
    %v916 = vmul.f32 %v867, %v506
    %v917 = vmul.f32 %v868, %v507
    %v918 = vmul.f32 %v869, %v508
    %v919 = vmul.f32 %v870, %v509
    %v920 = vmul.f32 %v871, %v510
    %v921 = vmul.f32 %v872, %v511
    %v922 = vmul.f32 %v873, %v512
    %v923 = vmul.f32 %v874, %v513
    %v924 = vadd.f32 %v875, %v876
    %v925 = vadd.f32 %v924, %v877
    %v926 = vadd.f32 %v925, %v878
    %v927 = vadd.f32 %v926, %v879
    %v928 = vadd.f32 %v927, %v880
    %v929 = vadd.f32 %v928, %v881
    %v930 = vadd.f32 %v929, %v882
    %v931 = vadd.f32 %v930, %v883
    %v932 = vadd.f32 %v931, %v884
    %v933 = vadd.f32 %v932, %v885
    %v934 = vadd.f32 %v933, %v886
    %v935 = vadd.f32 %v934, %v887
    %v936 = vadd.f32 %v935, %v888
    %v937 = vadd.f32 %v936, %v889
    %v938 = vadd.f32 %v937, %v890
    %v939 = vadd.f32 %v938, %v891
    %v940 = vadd.f32 %v939, %v892
    %v941 = vadd.f32 %v940, %v893
    %v942 = vadd.f32 %v941, %v894
    %v943 = vadd.f32 %v942, %v895
    %v944 = vadd.f32 %v943, %v896
    %v945 = vadd.f32 %v944, %v897
    %v946 = vadd.f32 %v945, %v898
    %v947 = vadd.f32 %v946, %v899
    %v948 = vadd.f32 %v947, %v900
    %v949 = vadd.f32 %v948, %v901
    %v950 = vadd.f32 %v949, %v902
    %v951 = vadd.f32 %v950, %v903
    %v952 = vadd.f32 %v951, %v904
    %v953 = vadd.f32 %v952, %v905
    %v954 = vadd.f32 %v953, %v906
    %v955 = vadd.f32 %v954, %v907
    %v956 = vadd.f32 %v955, %v908
    %v957 = vadd.f32 %v956, %v909
    %v958 = vadd.f32 %v957, %v910
    %v959 = vadd.f32 %v958, %v911
    %v960 = vadd.f32 %v959, %v912
    %v961 = vadd.f32 %v960, %v913
    %v962 = vadd.f32 %v961, %v914
    %v963 = vadd.f32 %v962, %v915
    %v964 = vadd.f32 %v963, %v916
    %v965 = vadd.f32 %v964, %v917
    %v966 = vadd.f32 %v965, %v918
    %v967 = vadd.f32 %v966, %v919
    %v968 = vadd.f32 %v967, %v920
    %v969 = vadd.f32 %v968, %v921
    %v970 = vadd.f32 %v969, %v922
    %v971 = vadd.f32 %v970, %v923
    %v972 = vrot.slane %v971, 4
    %v973 = vadd.f32 %v971, %v972
    %v974 = vrot.slane %v973, 2
    %v975 = vadd.f32 %v973, %v974
    %v976 = vrot.slane %v975, 1
    %v977 = vadd.f32 %v975, %v976
    %v978 = vld [vmem:[#allocation2 + $0x2] sm:$0x1]
    %v979 = vadd.f32 %v978, %v977
    %980 = vst [vmem:[#allocation2 + $0x2] sm:$0x1] %v979
    %s981 = scalar_lea.vmem [#allocation7], 1176
    %v982 = vld [vmem:[%s981] sm:$0xff]
    %v983 = vld [vmem:[%s981 + $0x8] sm:$0xff]
    %v984 = vld [vmem:[%s981 + $0x10] sm:$0xff]
    %v985 = vld [vmem:[%s981 + $0x18] sm:$0xff]
    %v986 = vld [vmem:[%s981 + $0x20] sm:$0xff]
    %v987 = vld [vmem:[%s981 + $0x28] sm:$0xff]
    %v988 = vld [vmem:[%s981 + $0x30] sm:$0xff]
    %v989 = vld [vmem:[%s981 + $0x38] sm:$0xff]
    %v990 = vld [vmem:[%s981 + $0x40] sm:$0xff]
    %v991 = vld [vmem:[%s981 + $0x48] sm:$0xff]
    %v992 = vld [vmem:[%s981 + $0x50] sm:$0xff]
    %v993 = vld [vmem:[%s981 + $0x58] sm:$0xff]
    %v994 = vld [vmem:[%s981 + $0x60] sm:$0xff]
    %v995 = vld [vmem:[%s981 + $0x68] sm:$0xff]
    %v996 = vld [vmem:[%s981 + $0x70] sm:$0xff]
    %v997 = vld [vmem:[%s981 + $0x78] sm:$0xff]
    %v998 = vld [vmem:[%s981 + $0x80] sm:$0xff]
    %v999 = vld [vmem:[%s981 + $0x88] sm:$0xff]
    %v1000 = vld [vmem:[%s981 + $0x90] sm:$0xff]
    %v1001 = vld [vmem:[%s981 + $0x98] sm:$0xff]
    %v1002 = vld [vmem:[%s981 + $0xa0] sm:$0xff]
    %v1003 = vld [vmem:[%s981 + $0xa8] sm:$0xff]
    %v1004 = vld [vmem:[%s981 + $0xb0] sm:$0xff]
    %v1005 = vld [vmem:[%s981 + $0xb8] sm:$0xff]
    %v1006 = vld [vmem:[%s981 + $0xc0] sm:$0xff]
    %v1007 = vld [vmem:[%s981 + $0xc8] sm:$0xff]
    %v1008 = vld [vmem:[%s981 + $0xd0] sm:$0xff]
    %v1009 = vld [vmem:[%s981 + $0xd8] sm:$0xff]
    %v1010 = vld [vmem:[%s981 + $0xe0] sm:$0xff]
    %v1011 = vld [vmem:[%s981 + $0xe8] sm:$0xff]
    %v1012 = vld [vmem:[%s981 + $0xf0] sm:$0xff]
    %v1013 = vld [vmem:[%s981 + $0xf8] sm:$0xff]
    %v1014 = vld [vmem:[%s981 + $0x100] sm:$0xff]
    %v1015 = vld [vmem:[%s981 + $0x108] sm:$0xff]
    %v1016 = vld [vmem:[%s981 + $0x110] sm:$0xff]
    %v1017 = vld [vmem:[%s981 + $0x118] sm:$0xff]
    %v1018 = vld [vmem:[%s981 + $0x120] sm:$0xff]
    %v1019 = vld [vmem:[%s981 + $0x128] sm:$0xff]
    %v1020 = vld [vmem:[%s981 + $0x130] sm:$0xff]
    %v1021 = vld [vmem:[%s981 + $0x138] sm:$0xff]
    %v1022 = vld [vmem:[%s981 + $0x140] sm:$0xff]
    %v1023 = vld [vmem:[%s981 + $0x148] sm:$0xff]
    %v1024 = vld [vmem:[%s981 + $0x150] sm:$0xff]
    %v1025 = vld [vmem:[%s981 + $0x158] sm:$0xff]
    %v1026 = vld [vmem:[%s981 + $0x160] sm:$0xff]
    %v1027 = vld [vmem:[%s981 + $0x168] sm:$0xff]
    %v1028 = vld [vmem:[%s981 + $0x170] sm:$0xff]
    %v1029 = vld [vmem:[%s981 + $0x178] sm:$0xff]
    %v1030 = vld [vmem:[%s981 + $0x180] sm:$0xff]
    %v1031 = vmul.f32 %v982, %v465
    %v1032 = vmul.f32 %v983, %v466
    %v1033 = vmul.f32 %v984, %v467
    %v1034 = vmul.f32 %v985, %v468
    %v1035 = vmul.f32 %v986, %v469
    %v1036 = vmul.f32 %v987, %v470
    %v1037 = vmul.f32 %v988, %v471
    %v1038 = vmul.f32 %v989, %v472
    %v1039 = vmul.f32 %v990, %v473
    %v1040 = vmul.f32 %v991, %v474
    %v1041 = vmul.f32 %v992, %v475
    %v1042 = vmul.f32 %v993, %v476
    %v1043 = vmul.f32 %v994, %v477
    %v1044 = vmul.f32 %v995, %v478
    %v1045 = vmul.f32 %v996, %v479
    %v1046 = vmul.f32 %v997, %v480
    %v1047 = vmul.f32 %v998, %v481
    %v1048 = vmul.f32 %v999, %v482
    %v1049 = vmul.f32 %v1000, %v483
    %v1050 = vmul.f32 %v1001, %v484
    %v1051 = vmul.f32 %v1002, %v485
    %v1052 = vmul.f32 %v1003, %v486
    %v1053 = vmul.f32 %v1004, %v487
    %v1054 = vmul.f32 %v1005, %v488
    %v1055 = vmul.f32 %v1006, %v489
    %v1056 = vmul.f32 %v1007, %v490
    %v1057 = vmul.f32 %v1008, %v491
    %v1058 = vmul.f32 %v1009, %v492
    %v1059 = vmul.f32 %v1010, %v493
    %v1060 = vmul.f32 %v1011, %v494
    %v1061 = vmul.f32 %v1012, %v495
    %v1062 = vmul.f32 %v1013, %v496
    %v1063 = vmul.f32 %v1014, %v497
    %v1064 = vmul.f32 %v1015, %v498
    %v1065 = vmul.f32 %v1016, %v499
    %v1066 = vmul.f32 %v1017, %v500
    %v1067 = vmul.f32 %v1018, %v501
    %v1068 = vmul.f32 %v1019, %v502
    %v1069 = vmul.f32 %v1020, %v503
    %v1070 = vmul.f32 %v1021, %v504
    %v1071 = vmul.f32 %v1022, %v505
    %v1072 = vmul.f32 %v1023, %v506
    %v1073 = vmul.f32 %v1024, %v507
    %v1074 = vmul.f32 %v1025, %v508
    %v1075 = vmul.f32 %v1026, %v509
    %v1076 = vmul.f32 %v1027, %v510
    %v1077 = vmul.f32 %v1028, %v511
    %v1078 = vmul.f32 %v1029, %v512
    %v1079 = vmul.f32 %v1030, %v513
    %v1080 = vadd.f32 %v1031, %v1032
    %v1081 = vadd.f32 %v1080, %v1033
    %v1082 = vadd.f32 %v1081, %v1034
    %v1083 = vadd.f32 %v1082, %v1035
    %v1084 = vadd.f32 %v1083, %v1036
    %v1085 = vadd.f32 %v1084, %v1037
    %v1086 = vadd.f32 %v1085, %v1038
    %v1087 = vadd.f32 %v1086, %v1039
    %v1088 = vadd.f32 %v1087, %v1040
    %v1089 = vadd.f32 %v1088, %v1041
    %v1090 = vadd.f32 %v1089, %v1042
    %v1091 = vadd.f32 %v1090, %v1043
    %v1092 = vadd.f32 %v1091, %v1044
    %v1093 = vadd.f32 %v1092, %v1045
    %v1094 = vadd.f32 %v1093, %v1046
    %v1095 = vadd.f32 %v1094, %v1047
    %v1096 = vadd.f32 %v1095, %v1048
    %v1097 = vadd.f32 %v1096, %v1049
    %v1098 = vadd.f32 %v1097, %v1050
    %v1099 = vadd.f32 %v1098, %v1051
    %v1100 = vadd.f32 %v1099, %v1052
    %v1101 = vadd.f32 %v1100, %v1053
    %v1102 = vadd.f32 %v1101, %v1054
    %v1103 = vadd.f32 %v1102, %v1055
    %v1104 = vadd.f32 %v1103, %v1056
    %v1105 = vadd.f32 %v1104, %v1057
    %v1106 = vadd.f32 %v1105, %v1058
    %v1107 = vadd.f32 %v1106, %v1059
    %v1108 = vadd.f32 %v1107, %v1060
    %v1109 = vadd.f32 %v1108, %v1061
    %v1110 = vadd.f32 %v1109, %v1062
    %v1111 = vadd.f32 %v1110, %v1063
    %v1112 = vadd.f32 %v1111, %v1064
    %v1113 = vadd.f32 %v1112, %v1065
    %v1114 = vadd.f32 %v1113, %v1066
    %v1115 = vadd.f32 %v1114, %v1067
    %v1116 = vadd.f32 %v1115, %v1068
    %v1117 = vadd.f32 %v1116, %v1069
    %v1118 = vadd.f32 %v1117, %v1070
    %v1119 = vadd.f32 %v1118, %v1071
    %v1120 = vadd.f32 %v1119, %v1072
    %v1121 = vadd.f32 %v1120, %v1073
    %v1122 = vadd.f32 %v1121, %v1074
    %v1123 = vadd.f32 %v1122, %v1075
    %v1124 = vadd.f32 %v1123, %v1076
    %v1125 = vadd.f32 %v1124, %v1077
    %v1126 = vadd.f32 %v1125, %v1078
    %v1127 = vadd.f32 %v1126, %v1079
    %v1128 = vrot.slane %v1127, 4
    %v1129 = vadd.f32 %v1127, %v1128
    %v1130 = vrot.slane %v1129, 2
    %v1131 = vadd.f32 %v1129, %v1130
    %v1132 = vrot.slane %v1131, 1
    %v1133 = vadd.f32 %v1131, %v1132
    %v1134 = vld [vmem:[#allocation2 + $0x3] sm:$0x1]
    %v1135 = vadd.f32 %v1134, %v1133
    %1136 = vst [vmem:[#allocation2 + $0x3] sm:$0x1] %v1135
    %s1137 = scalar_lea.vmem [#allocation7], 1568
    %v1138 = vld [vmem:[%s1137] sm:$0xff]
    %v1139 = vld [vmem:[%s1137 + $0x8] sm:$0xff]
    %v1140 = vld [vmem:[%s1137 + $0x10] sm:$0xff]
    %v1141 = vld [vmem:[%s1137 + $0x18] sm:$0xff]
    %v1142 = vld [vmem:[%s1137 + $0x20] sm:$0xff]
    %v1143 = vld [vmem:[%s1137 + $0x28] sm:$0xff]
    %v1144 = vld [vmem:[%s1137 + $0x30] sm:$0xff]
    %v1145 = vld [vmem:[%s1137 + $0x38] sm:$0xff]
    %v1146 = vld [vmem:[%s1137 + $0x40] sm:$0xff]
    %v1147 = vld [vmem:[%s1137 + $0x48] sm:$0xff]
    %v1148 = vld [vmem:[%s1137 + $0x50] sm:$0xff]
    %v1149 = vld [vmem:[%s1137 + $0x58] sm:$0xff]
    %v1150 = vld [vmem:[%s1137 + $0x60] sm:$0xff]
    %v1151 = vld [vmem:[%s1137 + $0x68] sm:$0xff]
    %v1152 = vld [vmem:[%s1137 + $0x70] sm:$0xff]
    %v1153 = vld [vmem:[%s1137 + $0x78] sm:$0xff]
    %v1154 = vld [vmem:[%s1137 + $0x80] sm:$0xff]
    %v1155 = vld [vmem:[%s1137 + $0x88] sm:$0xff]
    %v1156 = vld [vmem:[%s1137 + $0x90] sm:$0xff]
    %v1157 = vld [vmem:[%s1137 + $0x98] sm:$0xff]
    %v1158 = vld [vmem:[%s1137 + $0xa0] sm:$0xff]
    %v1159 = vld [vmem:[%s1137 + $0xa8] sm:$0xff]
    %v1160 = vld [vmem:[%s1137 + $0xb0] sm:$0xff]
    %v1161 = vld [vmem:[%s1137 + $0xb8] sm:$0xff]
    %v1162 = vld [vmem:[%s1137 + $0xc0] sm:$0xff]
    %v1163 = vld [vmem:[%s1137 + $0xc8] sm:$0xff]
    %v1164 = vld [vmem:[%s1137 + $0xd0] sm:$0xff]
    %v1165 = vld [vmem:[%s1137 + $0xd8] sm:$0xff]
    %v1166 = vld [vmem:[%s1137 + $0xe0] sm:$0xff]
    %v1167 = vld [vmem:[%s1137 + $0xe8] sm:$0xff]
    %v1168 = vld [vmem:[%s1137 + $0xf0] sm:$0xff]
    %v1169 = vld [vmem:[%s1137 + $0xf8] sm:$0xff]
    %v1170 = vld [vmem:[%s1137 + $0x100] sm:$0xff]
    %v1171 = vld [vmem:[%s1137 + $0x108] sm:$0xff]
    %v1172 = vld [vmem:[%s1137 + $0x110] sm:$0xff]
    %v1173 = vld [vmem:[%s1137 + $0x118] sm:$0xff]
    %v1174 = vld [vmem:[%s1137 + $0x120] sm:$0xff]
    %v1175 = vld [vmem:[%s1137 + $0x128] sm:$0xff]
    %v1176 = vld [vmem:[%s1137 + $0x130] sm:$0xff]
    %v1177 = vld [vmem:[%s1137 + $0x138] sm:$0xff]
    %v1178 = vld [vmem:[%s1137 + $0x140] sm:$0xff]
    %v1179 = vld [vmem:[%s1137 + $0x148] sm:$0xff]
    %v1180 = vld [vmem:[%s1137 + $0x150] sm:$0xff]
    %v1181 = vld [vmem:[%s1137 + $0x158] sm:$0xff]
    %v1182 = vld [vmem:[%s1137 + $0x160] sm:$0xff]
    %v1183 = vld [vmem:[%s1137 + $0x168] sm:$0xff]
    %v1184 = vld [vmem:[%s1137 + $0x170] sm:$0xff]
    %v1185 = vld [vmem:[%s1137 + $0x178] sm:$0xff]
    %v1186 = vld [vmem:[%s1137 + $0x180] sm:$0xff]
    %v1187 = vmul.f32 %v1138, %v465
    %v1188 = vmul.f32 %v1139, %v466
    %v1189 = vmul.f32 %v1140, %v467
    %v1190 = vmul.f32 %v1141, %v468
    %v1191 = vmul.f32 %v1142, %v469
    %v1192 = vmul.f32 %v1143, %v470
    %v1193 = vmul.f32 %v1144, %v471
    %v1194 = vmul.f32 %v1145, %v472
    %v1195 = vmul.f32 %v1146, %v473
    %v1196 = vmul.f32 %v1147, %v474
    %v1197 = vmul.f32 %v1148, %v475
    %v1198 = vmul.f32 %v1149, %v476
    %v1199 = vmul.f32 %v1150, %v477
    %v1200 = vmul.f32 %v1151, %v478
    %v1201 = vmul.f32 %v1152, %v479
    %v1202 = vmul.f32 %v1153, %v480
    %v1203 = vmul.f32 %v1154, %v481
    %v1204 = vmul.f32 %v1155, %v482
    %v1205 = vmul.f32 %v1156, %v483
    %v1206 = vmul.f32 %v1157, %v484
    %v1207 = vmul.f32 %v1158, %v485
    %v1208 = vmul.f32 %v1159, %v486
    %v1209 = vmul.f32 %v1160, %v487
    %v1210 = vmul.f32 %v1161, %v488
    %v1211 = vmul.f32 %v1162, %v489
    %v1212 = vmul.f32 %v1163, %v490
    %v1213 = vmul.f32 %v1164, %v491
    %v1214 = vmul.f32 %v1165, %v492
    %v1215 = vmul.f32 %v1166, %v493
    %v1216 = vmul.f32 %v1167, %v494
    %v1217 = vmul.f32 %v1168, %v495
    %v1218 = vmul.f32 %v1169, %v496
    %v1219 = vmul.f32 %v1170, %v497
    %v1220 = vmul.f32 %v1171, %v498
    %v1221 = vmul.f32 %v1172, %v499
    %v1222 = vmul.f32 %v1173, %v500
    %v1223 = vmul.f32 %v1174, %v501
    %v1224 = vmul.f32 %v1175, %v502
    %v1225 = vmul.f32 %v1176, %v503
    %v1226 = vmul.f32 %v1177, %v504
    %v1227 = vmul.f32 %v1178, %v505
    %v1228 = vmul.f32 %v1179, %v506
    %v1229 = vmul.f32 %v1180, %v507
    %v1230 = vmul.f32 %v1181, %v508
    %v1231 = vmul.f32 %v1182, %v509
    %v1232 = vmul.f32 %v1183, %v510
    %v1233 = vmul.f32 %v1184, %v511
    %v1234 = vmul.f32 %v1185, %v512
    %v1235 = vmul.f32 %v1186, %v513
    %v1236 = vadd.f32 %v1187, %v1188
    %v1237 = vadd.f32 %v1236, %v1189
    %v1238 = vadd.f32 %v1237, %v1190
    %v1239 = vadd.f32 %v1238, %v1191
    %v1240 = vadd.f32 %v1239, %v1192
    %v1241 = vadd.f32 %v1240, %v1193
    %v1242 = vadd.f32 %v1241, %v1194
    %v1243 = vadd.f32 %v1242, %v1195
    %v1244 = vadd.f32 %v1243, %v1196
    %v1245 = vadd.f32 %v1244, %v1197
    %v1246 = vadd.f32 %v1245, %v1198
    %v1247 = vadd.f32 %v1246, %v1199
    %v1248 = vadd.f32 %v1247, %v1200
    %v1249 = vadd.f32 %v1248, %v1201
    %v1250 = vadd.f32 %v1249, %v1202
    %v1251 = vadd.f32 %v1250, %v1203
    %v1252 = vadd.f32 %v1251, %v1204
    %v1253 = vadd.f32 %v1252, %v1205
    %v1254 = vadd.f32 %v1253, %v1206
    %v1255 = vadd.f32 %v1254, %v1207
    %v1256 = vadd.f32 %v1255, %v1208
    %v1257 = vadd.f32 %v1256, %v1209
    %v1258 = vadd.f32 %v1257, %v1210
    %v1259 = vadd.f32 %v1258, %v1211
    %v1260 = vadd.f32 %v1259, %v1212
    %v1261 = vadd.f32 %v1260, %v1213
    %v1262 = vadd.f32 %v1261, %v1214
    %v1263 = vadd.f32 %v1262, %v1215
    %v1264 = vadd.f32 %v1263, %v1216
    %v1265 = vadd.f32 %v1264, %v1217
    %v1266 = vadd.f32 %v1265, %v1218
    %v1267 = vadd.f32 %v1266, %v1219
    %v1268 = vadd.f32 %v1267, %v1220
    %v1269 = vadd.f32 %v1268, %v1221
    %v1270 = vadd.f32 %v1269, %v1222
    %v1271 = vadd.f32 %v1270, %v1223
    %v1272 = vadd.f32 %v1271, %v1224
    %v1273 = vadd.f32 %v1272, %v1225
    %v1274 = vadd.f32 %v1273, %v1226
    %v1275 = vadd.f32 %v1274, %v1227
    %v1276 = vadd.f32 %v1275, %v1228
    %v1277 = vadd.f32 %v1276, %v1229
    %v1278 = vadd.f32 %v1277, %v1230
    %v1279 = vadd.f32 %v1278, %v1231
    %v1280 = vadd.f32 %v1279, %v1232
    %v1281 = vadd.f32 %v1280, %v1233
    %v1282 = vadd.f32 %v1281, %v1234
    %v1283 = vadd.f32 %v1282, %v1235
    %v1284 = vrot.slane %v1283, 4
    %v1285 = vadd.f32 %v1283, %v1284
    %v1286 = vrot.slane %v1285, 2
    %v1287 = vadd.f32 %v1285, %v1286
    %v1288 = vrot.slane %v1287, 1
    %v1289 = vadd.f32 %v1287, %v1288
    %v1290 = vld [vmem:[#allocation2 + $0x4] sm:$0x1]
    %v1291 = vadd.f32 %v1290, %v1289
    %1292 = vst [vmem:[#allocation2 + $0x4] sm:$0x1] %v1291
    // Predicated region
    $region34: #{tpu_custom_call.1} parent=1 // pred_check
      %p1293 = pneg %p58
    $region35: #{tpu_custom_call.1} parent=1 // pred_check_branch
      %1295 = sbr.rel (%p1293) target = $region37
    $region36: #{tpu_custom_call.1} parent=1 // pred_region
      %v1296 = vld [vmem:[#allocation2] sm:$0x1f]
      %vm1297 = vcmask 1044480
      %v1298 = vsel %vm1297, %v1296, 0.0
      %1299 = vadd.xlane.f32.xlu0 %v1298
      %v1300 = vpop.xlane.xlu0 %1299
      %v1301 = vld [vmem:[%s3] sm:$0x1f]
      %v1302 = vadd.f32 %v1300, %v1301
      %vm1303 = vcmask 4096
      %1304 = vst.msk [vmem:[%s4] sm:$0x1f] %vm1303, %v1302
    $region37: #{tpu_custom_call.1} parent=1 // pred_fallthru
      _
    // Predicated region
    $region38: #{tpu_custom_call.1} parent=1 // pred_check
      _
    $region39: #{tpu_custom_call.1} parent=1 // pred_check_branch
      %1306 = sbr.rel (0) target = $region41
    $region40: #{tpu_custom_call.1} parent=1 // pred_region
      _
    $region41: #{tpu_custom_call.1} parent=1 // pred_fallthru
      _
    // Predicated region
    $region42: #{tpu_custom_call.1} parent=1 // pred_check
      _
    $region43: #{tpu_custom_call.1} parent=1 // pred_check_branch
      %1308 = sbr.rel (0) target = $region45
    $region44: #{tpu_custom_call.1} parent=1 // pred_region
      _
    $region45: #{tpu_custom_call.1} parent=1 // pred_fallthru
      _
    %1309 = vsyncpa [#allocation4], 1
    %1310 = vsyncpa [#allocation8], 1
    %1311 = vsyncpa [#allocation5], 1

</llo_original>
